<compile_context>
chip_gen: v7x
topology: tpu7x:2x2x1
jax: 0.10.0
libtpu: 0.0.40
codegen_flags: <defaults>
</compile_context>

<pallas_src>
import functools
import math

import jax
import jax.numpy as jnp
from jax.experimental import pallas as pl
from jax.experimental.pallas import tpu as pltpu


# ---------------------------------------------------------------------------
# helpers
# ---------------------------------------------------------------------------
def _pick_row_tile(n_rows: int, n_cols: int, target_bytes: int = 2 << 20) -> int:
    """Rows per block: large enough to amortize pipeline overhead, multiple of 8."""
    rows = target_bytes // max(1, 4 * n_cols)
    rows = max(8, min(rows, 4096))
    rows = (rows // 8) * 8
    if rows >= n_rows:
        return n_rows            # full-extent block is always legal
    return rows


def _row_entropy(x):
    """Entropy of softmax over the last axis.  x: (tn, K) f32 -> (tn, 1) f32.

    H = -sum_j p_j log p_j = log(Z) - sum_j(e_j * s_j) / Z
    with s = x - max(x), e = exp(s), Z = sum(e).
    """
    s = x - jnp.max(x, axis=-1, keepdims=True)
    e = jnp.exp(s)
    z = jnp.sum(e, axis=-1, keepdims=True)
    dot = jnp.sum(e * s, axis=-1, keepdims=True)
    return jnp.log(z) - dot / z


# ---------------------------------------------------------------------------
# Kernel 1: fused softmax-entropy + mean reduction  (reduction='mean')
#   Accumulates the per-row entropy sum directly into the resident (1,1)
#   output block across the row grid; scales by 1/N in the last step.
# ---------------------------------------------------------------------------
def _entropy_mean_kernel(x_ref, o_ref, *, n_rows, row_tile):
    i = pl.program_id(0)

    @pl.when(i == 0)
    def _():
        o_ref[...] = jnp.zeros_like(o_ref)

    x = x_ref[...].astype(jnp.float32)
    ent = _row_entropy(x)                                           # (tn, 1)
    # mask the ragged tail (rows past n_rows contain garbage padding)
    row_ids = i * row_tile + jax.lax.broadcasted_iota(jnp.int32, ent.shape, 0)
    ent = jnp.where(row_ids < n_rows, ent, 0.0)
    o_ref[...] += jnp.sum(ent, axis=0, keepdims=True)

    @pl.when(i == pl.num_programs(0) - 1)
    def _():
        o_ref[...] = o_ref[...] * (1.0 / n_rows)


def _entropy_mean_2d(x2, row_tile=None):
    n, k = x2.shape
    tn = row_tile or _pick_row_tile(n, k)
    out = pl.pallas_call(
        functools.partial(_entropy_mean_kernel, n_rows=n, row_tile=tn),
        out_shape=jax.ShapeDtypeStruct((1, 1), jnp.float32),
        grid_spec=pltpu.PrefetchScalarGridSpec(
            num_scalar_prefetch=0,
            grid=(pl.cdiv(n, tn),),
            in_specs=[pl.BlockSpec((tn, k), lambda i: (i, 0))],
            out_specs=pl.BlockSpec((1, 1), lambda i: (0, 0)),
        ),
        compiler_params=pltpu.CompilerParams(
            dimension_semantics=("arbitrary",)),
    )(x2)
    return out[0, 0]


# ---------------------------------------------------------------------------
# Kernel 2: per-row entropy  (reduction='sum')
# ---------------------------------------------------------------------------
def _entropy_rows_kernel(x_ref, o_ref):
    x = x_ref[...].astype(jnp.float32)
    o_ref[...] = _row_entropy(x).astype(o_ref.dtype)


def _entropy_rows_2d(x2, row_tile=None):
    n, k = x2.shape
    tn = row_tile or _pick_row_tile(n, k)
    return pl.pallas_call(
        _entropy_rows_kernel,
        out_shape=jax.ShapeDtypeStruct((n, 1), x2.dtype),
        grid_spec=pltpu.PrefetchScalarGridSpec(
            num_scalar_prefetch=0,
            grid=(pl.cdiv(n, tn),),
            in_specs=[pl.BlockSpec((tn, k), lambda i: (i, 0))],
            out_specs=pl.BlockSpec((tn, 1), lambda i: (i, 0)),
        ),
        compiler_params=pltpu.CompilerParams(
            dimension_semantics=("parallel",)),
    )(x2)


# ---------------------------------------------------------------------------
# Kernel 3: elementwise entropy  -p * log_softmax  (reduction='none')
# ---------------------------------------------------------------------------
def _entropy_elem_kernel(x_ref, o_ref):
    x = x_ref[...].astype(jnp.float32)
    s = x - jnp.max(x, axis=-1, keepdims=True)
    e = jnp.exp(s)
    z = jnp.sum(e, axis=-1, keepdims=True)
    log_p = s - jnp.log(z)
    p = e / z
    o_ref[...] = (-p * log_p).astype(o_ref.dtype)


def _entropy_elem_2d(x2, row_tile=None):
    n, k = x2.shape
    tn = row_tile or _pick_row_tile(n, k)
    return pl.pallas_call(
        _entropy_elem_kernel,
        out_shape=jax.ShapeDtypeStruct((n, k), x2.dtype),
        grid_spec=pltpu.PrefetchScalarGridSpec(
            num_scalar_prefetch=0,
            grid=(pl.cdiv(n, tn),),
            in_specs=[pl.BlockSpec((tn, k), lambda i: (i, 0))],
            out_specs=pl.BlockSpec((tn, k), lambda i: (i, 0)),
        ),
        compiler_params=pltpu.CompilerParams(
            dimension_semantics=("parallel",)),
    )(x2)


# ---------------------------------------------------------------------------
# EntropyLoss.forward
# ---------------------------------------------------------------------------
def entropy_loss(logits, reduction="mean", *, row_tile=None):
    """Entropy of softmax(logits, dim=1); reduction in {'none','sum','mean'}."""
    if logits.ndim < 2:
        raise ValueError("logits must have a class dimension at dim=1")
    # Put the class dim on lanes (last axis) and flatten the rest into rows.
    # Layout plumbing only; a no-op for 2-D [B, K] inputs.
    x = jnp.moveaxis(logits, 1, -1)
    lead = x.shape[:-1]
    k = x.shape[-1]
    n = math.prod(lead)
    x2 = x.reshape(n, k)

    if reduction == "mean":
        return _entropy_mean_2d(x2, row_tile)
    if reduction == "sum":
        rows = _entropy_rows_2d(x2, row_tile)
        return rows.reshape(lead)
    if reduction == "none":
        elem = _entropy_elem_2d(x2, row_tile)
        return jnp.moveaxis(elem.reshape(lead + (k,)), -1, 1)
    raise ValueError(f"unknown reduction: {reduction!r}")


# ---------------------------------------------------------------------------
# demo / self-check
# ---------------------------------------------------------------------------
if __name__ == "__main__":
    key = jax.random.PRNGKey(0)
    k1, k2 = jax.random.split(key, 2)

    def ref_entropy(logits, reduction="mean"):
        p = jax.nn.softmax(logits, axis=1)
        elem = -p * jax.nn.log_softmax(logits, axis=1)
        if reduction == "none":
            return elem
        s = jnp.sum(elem, axis=1)
        return s if reduction == "sum" else jnp.mean(s)

    # Case 1: conv-style NCHW logits (softmax over channel dim=1), default 'mean'.
    x4 = jax.random.normal(k1, (2, 4, 16, 16), jnp.float32) * 3.0
    loss4 = entropy_loss(x4)                       # reduction='mean'
    jax.block_until_ready(loss4)
    assert loss4.shape == () and bool(jnp.isfinite(loss4))
    assert jnp.allclose(loss4, ref_entropy(x4), rtol=1e-5, atol=1e-6)

    # Case 2: classification logits, lane-dense class dim, multi-step grid with
    # a ragged tail (1000 rows, 128-row tiles) to exercise the masked path.
    x2 = jax.random.normal(k2, (1000, 128), jnp.float32) * 2.0
    loss2 = entropy_loss(x2, row_tile=128)
    assert jnp.allclose(loss2, ref_entropy(x2), rtol=1e-5, atol=1e-6)

    # Case 3: 'sum' and 'none' reductions on the NCHW input.
    s_out = entropy_loss(x4, reduction="sum")
    e_out = entropy_loss(x4, reduction="none")
    assert s_out.shape == (2, 16, 16)
    assert e_out.shape == x4.shape
    assert jnp.allclose(s_out, ref_entropy(x4, "sum"), rtol=1e-5, atol=1e-6)
    assert jnp.allclose(e_out, ref_entropy(x4, "none"), rtol=1e-5, atol=1e-6)

    jax.block_until_ready((loss2, s_out, e_out))
    print("KERNEL_OK")
</pallas_src>

<mosaic_0001>
module attributes {stable_mosaic.version = 11 : i64} {
  func.func @_entropy_mean_kernel(%arg0: i32, %arg1: memref<512x4xf32, #tpu.memory_space<vmem>>, %arg2: memref<1x1xf32, #tpu.memory_space<vmem>>) attributes {dimension_semantics = [#tpu.dimension_semantics<arbitrary>], iteration_bounds = array<i64: 1>, scalar_prefetch = 0 : i64, scratch_operands = 0 : i64, tpu.core_type = #tpu.core_type<tc>, window_params = [{transform_indices = @transform_0, window_bounds = array<i64: 512, 4>}, {pipeline_mode = #tpu.pipeline_mode<synchronous>, transform_indices = @transform_1, window_bounds = array<i64: 1, 1>}]} {
    %c0_i32 = arith.constant 0 : i32
    %0 = arith.cmpi eq, %arg0, %c0_i32 : i32
    %1 = arith.extui %0 : i1 to i32
    %c0_i32_0 = arith.constant 0 : i32
    %2 = arith.cmpi ne, %1, %c0_i32_0 : i32
    scf.if %2 {
      %cst_13 = arith.constant 0.000000e+00 : f32
      %33 = vector.broadcast %cst_13 : f32 to vector<1x1xf32>
      %c0_14 = arith.constant 0 : index
      %c0_15 = arith.constant 0 : index
      %34 = vector.load %arg2[%c0_14, %c0_15] : memref<1x1xf32, #tpu.memory_space<vmem>>, vector<1x1xf32>
      tpu.vector_store %arg2[%c0_14, %c0_15], %33 {strides = array<i32>} : memref<1x1xf32, #tpu.memory_space<vmem>>, vector<1x1xf32>,
    } else {
    }
    %c0 = arith.constant 0 : index
    %c0_1 = arith.constant 0 : index
    %3 = vector.load %arg1[%c0, %c0_1] : memref<512x4xf32, #tpu.memory_space<vmem>>, vector<512x4xf32>
    %cst = arith.constant dense<0xFF800000> : vector<512xf32>
    %4 = vector.multi_reduction <maximumf>, %3, %cst [1] : vector<512x4xf32> to vector<512xf32>
    %5 = vector.shape_cast %4 : vector<512xf32> to vector<512x1xf32>
    %6 = vector.broadcast %5 : vector<512x1xf32> to vector<512x4xf32>
    %7 = arith.subf %3, %6 : vector<512x4xf32>
    %8 = math.exp %7 : vector<512x4xf32>
    %cst_2 = arith.constant dense<0.000000e+00> : vector<512xf32>
    %9 = vector.multi_reduction <add>, %8, %cst_2 [1] : vector<512x4xf32> to vector<512xf32>
    %10 = vector.shape_cast %9 : vector<512xf32> to vector<512x1xf32>
    %11 = arith.mulf %8, %7 : vector<512x4xf32>
    %cst_3 = arith.constant dense<0.000000e+00> : vector<512xf32>
    %12 = vector.multi_reduction <add>, %11, %cst_3 [1] : vector<512x4xf32> to vector<512xf32>
    %13 = vector.shape_cast %12 : vector<512xf32> to vector<512x1xf32>
    %14 = math.log %10 : vector<512x1xf32>
    %15 = arith.divf %13, %10 : vector<512x1xf32>
    %16 = arith.subf %14, %15 : vector<512x1xf32>
    %c512_i32 = arith.constant 512 : i32
    %17 = arith.muli %arg0, %c512_i32 : i32
    %18 = tpu.iota {dimensions = array<i32: 0>} : vector<512x1xi32>
    %19 = vector.broadcast %17 : i32 to vector<512x1xi32>
    %20 = arith.addi %19, %18 : vector<512x1xi32>
    %c512_i32_4 = arith.constant 512 : i32
    %21 = vector.broadcast %c512_i32_4 : i32 to vector<512x1xi32>
    %22 = arith.cmpi slt, %20, %21 : vector<512x1xi32>
    %cst_5 = arith.constant 0.000000e+00 : f32
    %23 = vector.broadcast %cst_5 : f32 to vector<512x1xf32>
    %24 = arith.select %22, %16, %23 : vector<512x1xi1>, vector<512x1xf32>
    %c0_6 = arith.constant 0 : index
    %c0_7 = arith.constant 0 : index
    %25 = vector.load %arg2[%c0_6, %c0_7] : memref<1x1xf32, #tpu.memory_space<vmem>>, vector<1x1xf32>
    %cst_8 = arith.constant dense<0.000000e+00> : vector<1xf32>
    %26 = vector.multi_reduction <add>, %24, %cst_8 [0] : vector<512x1xf32> to vector<1xf32>
    %27 = vector.shape_cast %26 : vector<1xf32> to vector<1x1xf32>
    %28 = arith.addf %25, %27 : vector<1x1xf32>
    %c0_9 = arith.constant 0 : index
    %c0_10 = arith.constant 0 : index
    %29 = vector.load %arg2[%c0_9, %c0_10] : memref<1x1xf32, #tpu.memory_space<vmem>>, vector<1x1xf32>
    tpu.vector_store %arg2[%c0_9, %c0_10], %28 {strides = array<i32>} : memref<1x1xf32, #tpu.memory_space<vmem>>, vector<1x1xf32>,
    %c0_i32_11 = arith.constant 0 : i32
    %30 = arith.cmpi eq, %arg0, %c0_i32_11 : i32
    %31 = arith.extui %30 : i1 to i32
    %c0_i32_12 = arith.constant 0 : i32
    %32 = arith.cmpi ne, %31, %c0_i32_12 : i32
    scf.if %32 {
      %c0_13 = arith.constant 0 : index
      %c0_14 = arith.constant 0 : index
      %33 = vector.load %arg2[%c0_13, %c0_14] : memref<1x1xf32, #tpu.memory_space<vmem>>, vector<1x1xf32>
      %cst_15 = arith.constant 0.001953125 : f32
      %34 = vector.broadcast %cst_15 : f32 to vector<1x1xf32>
      %35 = arith.mulf %33, %34 : vector<1x1xf32>
      %c0_16 = arith.constant 0 : index
      %c0_17 = arith.constant 0 : index
      %36 = vector.load %arg2[%c0_16, %c0_17] : memref<1x1xf32, #tpu.memory_space<vmem>>, vector<1x1xf32>
      tpu.vector_store %arg2[%c0_16, %c0_17], %35 {strides = array<i32>} : memref<1x1xf32, #tpu.memory_space<vmem>>, vector<1x1xf32>,
    } else {
    }
    return
  }
  func.func @transform_0(%arg0: i32) -> (i32, i32) {
    %c0_i32 = arith.constant 0 : i32
    %c0_i32_0 = arith.constant 0 : i32
    return %arg0, %c0_i32 : i32, i32
  }
  func.func @transform_1(%arg0: i32) -> (i32, i32) {
    %c0_i32 = arith.constant 0 : i32
    %c0_i32_0 = arith.constant 0 : i32
    %c0_i32_1 = arith.constant 0 : i32
    return %c0_i32, %c0_i32_0 : i32, i32
  }
}

</mosaic_0001>

<llo_original>
// kernel: tpu_custom_call.1
$region0: #{tpu_custom_call.1}
  #allocation0 [shape = 'u32[]', space=smem, size = 0x4, offset = 0x4, fixed_abs, tag = 'smem constant byte address 0x4 - core index']
  #allocation1 [shape = 'u32[144,128]{1,0:T(1,128)}', space=vmem, size = 0x12000, scoped, tag = 'internal scratch']
  %s0 = inlined_call_operand.vmem [shape: f32[512,4], index: 0, kind: input, shape index: {}]
  %s1 = inlined_call_operand.hbm [shape: f32[1,1], index: 1, kind: output, shape index: {}]
  %s2 = sld [smem:[#allocation0]]
  $region22: #{tpu_custom_call.1} parent=0
    _
  %s4 = ssub.s32 1, %s2
  %s5 = scalar_select 0, %s4, %s2
  $region1: #{tpu_custom_call.1} parent=0
    #allocation2 [shape = 'u8[512]{0}', space=vmem, size = 0x400, scoped, tag = 'output window, operand 0, single buffered']
    #allocation3 [shape = 's32[1]{0}', space=sflag, size = 0x4, scoped, tag = 'scoped memory for tpu_custom_call.1']
    %6 = vsyncpa [#allocation3], 0
    // Predicated region
    $region2: #{tpu_custom_call.1} parent=1 // pred_check
      _
    $region3: #{tpu_custom_call.1} parent=1 // pred_check_branch
      %8 = sbr.rel (0) target = $region5
    $region4: #{tpu_custom_call.1} parent=1 // pred_region
      _
    $region5: #{tpu_custom_call.1} parent=1 // pred_fallthru
      _
    %p9 = scmp.eq.s32.totalorder 0, 0
    // Predicated region
    $region6: #{tpu_custom_call.1} parent=1 // pred_check
      %p10 = pneg %p9
    $region7: #{tpu_custom_call.1} parent=1 // pred_check_branch
      %12 = sbr.rel (%p10) target = $region9
    $region8: #{tpu_custom_call.1} parent=1 // pred_region
      %vm13 = vcmask 0
      %14 = vst.msk [vmem:[#allocation2] sm:$0x1] %vm13, 0.0
    $region9: #{tpu_custom_call.1} parent=1 // pred_fallthru
      _
    %v15 = vld [vmem:[%s0] sm:$0xff]
    %v16 = vld [vmem:[%s0 + $0x8] sm:$0xff]
    %v17 = vld [vmem:[%s0 + $0x10] sm:$0xff]
    %v18 = vld [vmem:[%s0 + $0x18] sm:$0xff]
    %v19 = vld [vmem:[%s0 + $0x20] sm:$0xff]
    %v20 = vld [vmem:[%s0 + $0x28] sm:$0xff]
    %v21 = vld [vmem:[%s0 + $0x30] sm:$0xff]
    %v22 = vld [vmem:[%s0 + $0x38] sm:$0xff]
    %v23 = vld [vmem:[%s0 + $0x40] sm:$0xff]
    %v24 = vld [vmem:[%s0 + $0x48] sm:$0xff]
    %v25 = vld [vmem:[%s0 + $0x50] sm:$0xff]
    %v26 = vld [vmem:[%s0 + $0x58] sm:$0xff]
    %v27 = vld [vmem:[%s0 + $0x60] sm:$0xff]
    %v28 = vld [vmem:[%s0 + $0x68] sm:$0xff]
    %v29 = vld [vmem:[%s0 + $0x70] sm:$0xff]
    %v30 = vld [vmem:[%s0 + $0x78] sm:$0xff]
    %v31 = vld [vmem:[%s0 + $0x80] sm:$0xff]
    %v32 = vld [vmem:[%s0 + $0x88] sm:$0xff]
    %v33 = vld [vmem:[%s0 + $0x90] sm:$0xff]
    %v34 = vld [vmem:[%s0 + $0x98] sm:$0xff]
    %v35 = vld [vmem:[%s0 + $0xa0] sm:$0xff]
    %v36 = vld [vmem:[%s0 + $0xa8] sm:$0xff]
    %v37 = vld [vmem:[%s0 + $0xb0] sm:$0xff]
    %v38 = vld [vmem:[%s0 + $0xb8] sm:$0xff]
    %v39 = vld [vmem:[%s0 + $0xc0] sm:$0xff]
    %v40 = vld [vmem:[%s0 + $0xc8] sm:$0xff]
    %v41 = vld [vmem:[%s0 + $0xd0] sm:$0xff]
    %v42 = vld [vmem:[%s0 + $0xd8] sm:$0xff]
    %v43 = vld [vmem:[%s0 + $0xe0] sm:$0xff]
    %v44 = vld [vmem:[%s0 + $0xe8] sm:$0xff]
    %v45 = vld [vmem:[%s0 + $0xf0] sm:$0xff]
    %v46 = vld [vmem:[%s0 + $0xf8] sm:$0xff]
    %v47 = vld [vmem:[%s0 + $0x100] sm:$0xff]
    %v48 = vld [vmem:[%s0 + $0x108] sm:$0xff]
    %v49 = vld [vmem:[%s0 + $0x110] sm:$0xff]
    %v50 = vld [vmem:[%s0 + $0x118] sm:$0xff]
    %v51 = vld [vmem:[%s0 + $0x120] sm:$0xff]
    %v52 = vld [vmem:[%s0 + $0x128] sm:$0xff]
    %v53 = vld [vmem:[%s0 + $0x130] sm:$0xff]
    %v54 = vld [vmem:[%s0 + $0x138] sm:$0xff]
    %v55 = vld [vmem:[%s0 + $0x140] sm:$0xff]
    %v56 = vld [vmem:[%s0 + $0x148] sm:$0xff]
    %v57 = vld [vmem:[%s0 + $0x150] sm:$0xff]
    %v58 = vld [vmem:[%s0 + $0x158] sm:$0xff]
    %v59 = vld [vmem:[%s0 + $0x160] sm:$0xff]
    %v60 = vld [vmem:[%s0 + $0x168] sm:$0xff]
    %v61 = vld [vmem:[%s0 + $0x170] sm:$0xff]
    %v62 = vld [vmem:[%s0 + $0x178] sm:$0xff]
    %v63 = vld [vmem:[%s0 + $0x180] sm:$0xff]
    %v64 = vld [vmem:[%s0 + $0x188] sm:$0xff]
    %v65 = vld [vmem:[%s0 + $0x190] sm:$0xff]
    %v66 = vld [vmem:[%s0 + $0x198] sm:$0xff]
    %v67 = vld [vmem:[%s0 + $0x1a0] sm:$0xff]
    %v68 = vld [vmem:[%s0 + $0x1a8] sm:$0xff]
    %v69 = vld [vmem:[%s0 + $0x1b0] sm:$0xff]
    %v70 = vld [vmem:[%s0 + $0x1b8] sm:$0xff]
    %v71 = vld [vmem:[%s0 + $0x1c0] sm:$0xff]
    %v72 = vld [vmem:[%s0 + $0x1c8] sm:$0xff]
    %v73 = vld [vmem:[%s0 + $0x1d0] sm:$0xff]
    %v74 = vld [vmem:[%s0 + $0x1d8] sm:$0xff]
    %v75 = vld [vmem:[%s0 + $0x1e0] sm:$0xff]
    %v76 = vld [vmem:[%s0 + $0x1e8] sm:$0xff]
    %v77 = vld [vmem:[%s0 + $0x1f0] sm:$0xff]
    %v78 = vld [vmem:[%s0 + $0x1f8] sm:$0xff]
    %vm79 = vcmask 31744
    %v80 = vsel %vm79, %v15, -inf
    %81 = vmax.xlane.f32.xlu0 %v80
    %v82 = vpop.xlane.xlu0 %81
    %v83 = vsel %vm79, %v16, -inf
    %84 = vmax.xlane.f32.xlu0 %v83
    %v85 = vpop.xlane.xlu0 %84
    %v86 = vsel %vm79, %v17, -inf
    %87 = vmax.xlane.f32.xlu0 %v86
    %v88 = vpop.xlane.xlu0 %87
    %v89 = vsel %vm79, %v18, -inf
    %90 = vmax.xlane.f32.xlu0 %v89
    %v91 = vpop.xlane.xlu0 %90
    %v92 = vsel %vm79, %v19, -inf
    %93 = vmax.xlane.f32.xlu0 %v92
    %v94 = vpop.xlane.xlu0 %93
    %v95 = vsel %vm79, %v20, -inf
    %96 = vmax.xlane.f32.xlu0 %v95
    %v97 = vpop.xlane.xlu0 %96
    %v98 = vsel %vm79, %v21, -inf
    %99 = vmax.xlane.f32.xlu0 %v98
    %v100 = vpop.xlane.xlu0 %99
    %v101 = vsel %vm79, %v22, -inf
    %102 = vmax.xlane.f32.xlu0 %v101
    %v103 = vpop.xlane.xlu0 %102
    %v104 = vsel %vm79, %v23, -inf
    %105 = vmax.xlane.f32.xlu0 %v104
    %v106 = vpop.xlane.xlu0 %105
    %v107 = vsel %vm79, %v24, -inf
    %108 = vmax.xlane.f32.xlu0 %v107
    %v109 = vpop.xlane.xlu0 %108
    %v110 = vsel %vm79, %v25, -inf
    %111 = vmax.xlane.f32.xlu0 %v110
    %v112 = vpop.xlane.xlu0 %111
    %v113 = vsel %vm79, %v26, -inf
    %114 = vmax.xlane.f32.xlu0 %v113
    %v115 = vpop.xlane.xlu0 %114
    %v116 = vsel %vm79, %v27, -inf
    %117 = vmax.xlane.f32.xlu0 %v116
    %v118 = vpop.xlane.xlu0 %117
    %v119 = vsel %vm79, %v28, -inf
    %120 = vmax.xlane.f32.xlu0 %v119
    %v121 = vpop.xlane.xlu0 %120
    %v122 = vsel %vm79, %v29, -inf
    %123 = vmax.xlane.f32.xlu0 %v122
    %v124 = vpop.xlane.xlu0 %123
    %v125 = vsel %vm79, %v30, -inf
    %126 = vmax.xlane.f32.xlu0 %v125
    %v127 = vpop.xlane.xlu0 %126
    %v128 = vsel %vm79, %v31, -inf
    %129 = vmax.xlane.f32.xlu0 %v128
    %v130 = vpop.xlane.xlu0 %129
    %v131 = vsel %vm79, %v32, -inf
    %132 = vmax.xlane.f32.xlu0 %v131
    %v133 = vpop.xlane.xlu0 %132
    %v134 = vsel %vm79, %v33, -inf
    %135 = vmax.xlane.f32.xlu0 %v134
    %v136 = vpop.xlane.xlu0 %135
    %v137 = vsel %vm79, %v34, -inf
    %138 = vmax.xlane.f32.xlu0 %v137
    %v139 = vpop.xlane.xlu0 %138
    %v140 = vsel %vm79, %v35, -inf
    %141 = vmax.xlane.f32.xlu0 %v140
    %v142 = vpop.xlane.xlu0 %141
    %v143 = vsel %vm79, %v36, -inf
    %144 = vmax.xlane.f32.xlu0 %v143
    %v145 = vpop.xlane.xlu0 %144
    %v146 = vsel %vm79, %v37, -inf
    %147 = vmax.xlane.f32.xlu0 %v146
    %v148 = vpop.xlane.xlu0 %147
    %v149 = vsel %vm79, %v38, -inf
    %150 = vmax.xlane.f32.xlu0 %v149
    %v151 = vpop.xlane.xlu0 %150
    %v152 = vsel %vm79, %v39, -inf
    %153 = vmax.xlane.f32.xlu0 %v152
    %v154 = vpop.xlane.xlu0 %153
    %v155 = vsel %vm79, %v40, -inf
    %156 = vmax.xlane.f32.xlu0 %v155
    %v157 = vpop.xlane.xlu0 %156
    %v158 = vsel %vm79, %v41, -inf
    %159 = vmax.xlane.f32.xlu0 %v158
    %v160 = vpop.xlane.xlu0 %159
    %v161 = vsel %vm79, %v42, -inf
    %162 = vmax.xlane.f32.xlu0 %v161
    %v163 = vpop.xlane.xlu0 %162
    %v164 = vsel %vm79, %v43, -inf
    %165 = vmax.xlane.f32.xlu0 %v164
    %v166 = vpop.xlane.xlu0 %165
    %v167 = vsel %vm79, %v44, -inf
    %168 = vmax.xlane.f32.xlu0 %v167
    %v169 = vpop.xlane.xlu0 %168
    %v170 = vsel %vm79, %v45, -inf
    %171 = vmax.xlane.f32.xlu0 %v170
    %v172 = vpop.xlane.xlu0 %171
    %v173 = vsel %vm79, %v46, -inf
    %174 = vmax.xlane.f32.xlu0 %v173
    %v175 = vpop.xlane.xlu0 %174
    %v176 = vsel %vm79, %v47, -inf
    %177 = vmax.xlane.f32.xlu0 %v176
    %v178 = vpop.xlane.xlu0 %177
    %v179 = vsel %vm79, %v48, -inf
    %180 = vmax.xlane.f32.xlu0 %v179
    %v181 = vpop.xlane.xlu0 %180
    %v182 = vsel %vm79, %v49, -inf
    %183 = vmax.xlane.f32.xlu0 %v182
    %v184 = vpop.xlane.xlu0 %183
    %v185 = vsel %vm79, %v50, -inf
    %186 = vmax.xlane.f32.xlu0 %v185
    %v187 = vpop.xlane.xlu0 %186
    %v188 = vsel %vm79, %v51, -inf
    %189 = vmax.xlane.f32.xlu0 %v188
    %v190 = vpop.xlane.xlu0 %189
    %v191 = vsel %vm79, %v52, -inf
    %192 = vmax.xlane.f32.xlu0 %v191
    %v193 = vpop.xlane.xlu0 %192
    %v194 = vsel %vm79, %v53, -inf
    %195 = vmax.xlane.f32.xlu0 %v194
    %v196 = vpop.xlane.xlu0 %195
    %v197 = vsel %vm79, %v54, -inf
    %198 = vmax.xlane.f32.xlu0 %v197
    %v199 = vpop.xlane.xlu0 %198
    %v200 = vsel %vm79, %v55, -inf
    %201 = vmax.xlane.f32.xlu0 %v200
    %v202 = vpop.xlane.xlu0 %201
    %v203 = vsel %vm79, %v56, -inf
    %204 = vmax.xlane.f32.xlu0 %v203
    %v205 = vpop.xlane.xlu0 %204
    %v206 = vsel %vm79, %v57, -inf
    %207 = vmax.xlane.f32.xlu0 %v206
    %v208 = vpop.xlane.xlu0 %207
    %v209 = vsel %vm79, %v58, -inf
    %210 = vmax.xlane.f32.xlu0 %v209
    %v211 = vpop.xlane.xlu0 %210
    %v212 = vsel %vm79, %v59, -inf
    %213 = vmax.xlane.f32.xlu0 %v212
    %v214 = vpop.xlane.xlu0 %213
    %v215 = vsel %vm79, %v60, -inf
    %216 = vmax.xlane.f32.xlu0 %v215
    %v217 = vpop.xlane.xlu0 %216
    %v218 = vsel %vm79, %v61, -inf
    %219 = vmax.xlane.f32.xlu0 %v218
    %v220 = vpop.xlane.xlu0 %219
    %v221 = vsel %vm79, %v62, -inf
    %222 = vmax.xlane.f32.xlu0 %v221
    %v223 = vpop.xlane.xlu0 %222
    %v224 = vsel %vm79, %v63, -inf
    %225 = vmax.xlane.f32.xlu0 %v224
    %v226 = vpop.xlane.xlu0 %225
    %v227 = vsel %vm79, %v64, -inf
    %228 = vmax.xlane.f32.xlu0 %v227
    %v229 = vpop.xlane.xlu0 %228
    %v230 = vsel %vm79, %v65, -inf
    %231 = vmax.xlane.f32.xlu0 %v230
    %v232 = vpop.xlane.xlu0 %231
    %v233 = vsel %vm79, %v66, -inf
    %234 = vmax.xlane.f32.xlu0 %v233
    %v235 = vpop.xlane.xlu0 %234
    %v236 = vsel %vm79, %v67, -inf
    %237 = vmax.xlane.f32.xlu0 %v236
    %v238 = vpop.xlane.xlu0 %237
    %v239 = vsel %vm79, %v68, -inf
    %240 = vmax.xlane.f32.xlu0 %v239
    %v241 = vpop.xlane.xlu0 %240
    %v242 = vsel %vm79, %v69, -inf
    %243 = vmax.xlane.f32.xlu0 %v242
    %v244 = vpop.xlane.xlu0 %243
    %v245 = vsel %vm79, %v70, -inf
    %246 = vmax.xlane.f32.xlu0 %v245
    %v247 = vpop.xlane.xlu0 %246
    %v248 = vsel %vm79, %v71, -inf
    %249 = vmax.xlane.f32.xlu0 %v248
    %v250 = vpop.xlane.xlu0 %249
    %v251 = vsel %vm79, %v72, -inf
    %252 = vmax.xlane.f32.xlu0 %v251
    %v253 = vpop.xlane.xlu0 %252
    %v254 = vsel %vm79, %v73, -inf
    %255 = vmax.xlane.f32.xlu0 %v254
    %v256 = vpop.xlane.xlu0 %255
    %v257 = vsel %vm79, %v74, -inf
    %258 = vmax.xlane.f32.xlu0 %v257
    %v259 = vpop.xlane.xlu0 %258
    %v260 = vsel %vm79, %v75, -inf
    %261 = vmax.xlane.f32.xlu0 %v260
    %v262 = vpop.xlane.xlu0 %261
    %v263 = vsel %vm79, %v76, -inf
    %264 = vmax.xlane.f32.xlu0 %v263
    %v265 = vpop.xlane.xlu0 %264
    %v266 = vsel %vm79, %v77, -inf
    %267 = vmax.xlane.f32.xlu0 %v266
    %v268 = vpop.xlane.xlu0 %267
    %v269 = vsel %vm79, %v78, -inf
    %270 = vmax.xlane.f32.xlu0 %v269
    %v271 = vpop.xlane.xlu0 %270
    %v272 = vsub.f32 %v15, %v82
    %v273 = vsub.f32 %v16, %v85
    %v274 = vsub.f32 %v17, %v88
    %v275 = vsub.f32 %v18, %v91
    %v276 = vsub.f32 %v19, %v94
    %v277 = vsub.f32 %v20, %v97
    %v278 = vsub.f32 %v21, %v100
    %v279 = vsub.f32 %v22, %v103
    %v280 = vsub.f32 %v23, %v106
    %v281 = vsub.f32 %v24, %v109
    %v282 = vsub.f32 %v25, %v112
    %v283 = vsub.f32 %v26, %v115
    %v284 = vsub.f32 %v27, %v118
    %v285 = vsub.f32 %v28, %v121
    %v286 = vsub.f32 %v29, %v124
    %v287 = vsub.f32 %v30, %v127
    %v288 = vsub.f32 %v31, %v130
    %v289 = vsub.f32 %v32, %v133
    %v290 = vsub.f32 %v33, %v136
    %v291 = vsub.f32 %v34, %v139
    %v292 = vsub.f32 %v35, %v142
    %v293 = vsub.f32 %v36, %v145
    %v294 = vsub.f32 %v37, %v148
    %v295 = vsub.f32 %v38, %v151
    %v296 = vsub.f32 %v39, %v154
    %v297 = vsub.f32 %v40, %v157
    %v298 = vsub.f32 %v41, %v160
    %v299 = vsub.f32 %v42, %v163
    %v300 = vsub.f32 %v43, %v166
    %v301 = vsub.f32 %v44, %v169
    %v302 = vsub.f32 %v45, %v172
    %v303 = vsub.f32 %v46, %v175
    %v304 = vsub.f32 %v47, %v178
    %v305 = vsub.f32 %v48, %v181
    %v306 = vsub.f32 %v49, %v184
    %v307 = vsub.f32 %v50, %v187
    %v308 = vsub.f32 %v51, %v190
    %v309 = vsub.f32 %v52, %v193
    %v310 = vsub.f32 %v53, %v196
    %v311 = vsub.f32 %v54, %v199
    %v312 = vsub.f32 %v55, %v202
    %v313 = vsub.f32 %v56, %v205
    %v314 = vsub.f32 %v57, %v208
    %v315 = vsub.f32 %v58, %v211
    %v316 = vsub.f32 %v59, %v214
    %v317 = vsub.f32 %v60, %v217
    %v318 = vsub.f32 %v61, %v220
    %v319 = vsub.f32 %v62, %v223
    %v320 = vsub.f32 %v63, %v226
    %v321 = vsub.f32 %v64, %v229
    %v322 = vsub.f32 %v65, %v232
    %v323 = vsub.f32 %v66, %v235
    %v324 = vsub.f32 %v67, %v238
    %v325 = vsub.f32 %v68, %v241
    %v326 = vsub.f32 %v69, %v244
    %v327 = vsub.f32 %v70, %v247
    %v328 = vsub.f32 %v71, %v250
    %v329 = vsub.f32 %v72, %v253
    %v330 = vsub.f32 %v73, %v256
    %v331 = vsub.f32 %v74, %v259
    %v332 = vsub.f32 %v75, %v262
    %v333 = vsub.f32 %v76, %v265
    %v334 = vsub.f32 %v77, %v268
    %v335 = vsub.f32 %v78, %v271
    %v336 = vmul.f32 %v272, 1.442695
    %v337 = vpow.pop %v336
    %v338 = vmul.f32 %v273, 1.442695
    %v339 = vpow.pop %v338
    %v340 = vmul.f32 %v274, 1.442695
    %v341 = vpow.pop %v340
    %v342 = vmul.f32 %v275, 1.442695
    %v343 = vpow.pop %v342
    %v344 = vmul.f32 %v276, 1.442695
    %v345 = vpow.pop %v344
    %v346 = vmul.f32 %v277, 1.442695
    %v347 = vpow.pop %v346
    %v348 = vmul.f32 %v278, 1.442695
    %v349 = vpow.pop %v348
    %v350 = vmul.f32 %v279, 1.442695
    %v351 = vpow.pop %v350
    %v352 = vmul.f32 %v280, 1.442695
    %v353 = vpow.pop %v352
    %v354 = vmul.f32 %v281, 1.442695
    %v355 = vpow.pop %v354
    %v356 = vmul.f32 %v282, 1.442695
    %v357 = vpow.pop %v356
    %v358 = vmul.f32 %v283, 1.442695
    %v359 = vpow.pop %v358
    %v360 = vmul.f32 %v284, 1.442695
    %v361 = vpow.pop %v360
    %v362 = vmul.f32 %v285, 1.442695
    %v363 = vpow.pop %v362
    %v364 = vmul.f32 %v286, 1.442695
    %v365 = vpow.pop %v364
    %v366 = vmul.f32 %v287, 1.442695
    %v367 = vpow.pop %v366
    %v368 = vmul.f32 %v288, 1.442695
    %v369 = vpow.pop %v368
    %v370 = vmul.f32 %v289, 1.442695
    %v371 = vpow.pop %v370
    %v372 = vmul.f32 %v290, 1.442695
    %v373 = vpow.pop %v372
    %v374 = vmul.f32 %v291, 1.442695
    %v375 = vpow.pop %v374
    %v376 = vmul.f32 %v292, 1.442695
    %v377 = vpow.pop %v376
    %v378 = vmul.f32 %v293, 1.442695
    %v379 = vpow.pop %v378
    %v380 = vmul.f32 %v294, 1.442695
    %v381 = vpow.pop %v380
    %v382 = vmul.f32 %v295, 1.442695
    %v383 = vpow.pop %v382
    %v384 = vmul.f32 %v296, 1.442695
    %v385 = vpow.pop %v384
    %v386 = vmul.f32 %v297, 1.442695
    %v387 = vpow.pop %v386
    %v388 = vmul.f32 %v298, 1.442695
    %v389 = vpow.pop %v388
    %v390 = vmul.f32 %v299, 1.442695
    %v391 = vpow.pop %v390
    %v392 = vmul.f32 %v300, 1.442695
    %v393 = vpow.pop %v392
    %v394 = vmul.f32 %v301, 1.442695
    %v395 = vpow.pop %v394
    %v396 = vmul.f32 %v302, 1.442695
    %v397 = vpow.pop %v396
    %v398 = vmul.f32 %v303, 1.442695
    %v399 = vpow.pop %v398
    %v400 = vmul.f32 %v304, 1.442695
    %v401 = vpow.pop %v400
    %v402 = vmul.f32 %v305, 1.442695
    %v403 = vpow.pop %v402
    %v404 = vmul.f32 %v306, 1.442695
    %v405 = vpow.pop %v404
    %v406 = vmul.f32 %v307, 1.442695
    %v407 = vpow.pop %v406
    %v408 = vmul.f32 %v308, 1.442695
    %v409 = vpow.pop %v408
    %v410 = vmul.f32 %v309, 1.442695
    %v411 = vpow.pop %v410
    %v412 = vmul.f32 %v310, 1.442695
    %v413 = vpow.pop %v412
    %v414 = vmul.f32 %v311, 1.442695
    %v415 = vpow.pop %v414
    %v416 = vmul.f32 %v312, 1.442695
    %v417 = vpow.pop %v416
    %v418 = vmul.f32 %v313, 1.442695
    %v419 = vpow.pop %v418
    %v420 = vmul.f32 %v314, 1.442695
    %v421 = vpow.pop %v420
    %v422 = vmul.f32 %v315, 1.442695
    %v423 = vpow.pop %v422
    %v424 = vmul.f32 %v316, 1.442695
    %v425 = vpow.pop %v424
    %v426 = vmul.f32 %v317, 1.442695
    %v427 = vpow.pop %v426
    %v428 = vmul.f32 %v318, 1.442695
    %v429 = vpow.pop %v428
    %v430 = vmul.f32 %v319, 1.442695
    %v431 = vpow.pop %v430
    %v432 = vmul.f32 %v320, 1.442695
    %v433 = vpow.pop %v432
    %v434 = vmul.f32 %v321, 1.442695
    %v435 = vpow.pop %v434
    %v436 = vmul.f32 %v322, 1.442695
    %v437 = vpow.pop %v436
    %v438 = vmul.f32 %v323, 1.442695
    %v439 = vpow.pop %v438
    %v440 = vmul.f32 %v324, 1.442695
    %v441 = vpow.pop %v440
    %v442 = vmul.f32 %v325, 1.442695
    %v443 = vpow.pop %v442
    %v444 = vmul.f32 %v326, 1.442695
    %v445 = vpow.pop %v444
    %v446 = vmul.f32 %v327, 1.442695
    %v447 = vpow.pop %v446
    %v448 = vmul.f32 %v328, 1.442695
    %v449 = vpow.pop %v448
    %v450 = vmul.f32 %v329, 1.442695
    %v451 = vpow.pop %v450
    %v452 = vmul.f32 %v330, 1.442695
    %v453 = vpow.pop %v452
    %v454 = vmul.f32 %v331, 1.442695
    %v455 = vpow.pop %v454
    %v456 = vmul.f32 %v332, 1.442695
    %v457 = vpow.pop %v456
    %v458 = vmul.f32 %v333, 1.442695
    %v459 = vpow.pop %v458
    %v460 = vmul.f32 %v334, 1.442695
    %v461 = vpow.pop %v460
    %v462 = vmul.f32 %v335, 1.442695
    %v463 = vpow.pop %v462
    %v464 = vsel %vm79, %v337, 0.0
    %465 = vadd.xlane.f32.xlu0 %v464
    %v466 = vpop.xlane.xlu0 %465
    %v467 = vsel %vm79, %v339, 0.0
    %468 = vadd.xlane.f32.xlu0 %v467
    %v469 = vpop.xlane.xlu0 %468
    %v470 = vsel %vm79, %v341, 0.0
    %471 = vadd.xlane.f32.xlu0 %v470
    %v472 = vpop.xlane.xlu0 %471
    %v473 = vsel %vm79, %v343, 0.0
    %474 = vadd.xlane.f32.xlu0 %v473
    %v475 = vpop.xlane.xlu0 %474
    %v476 = vsel %vm79, %v345, 0.0
    %477 = vadd.xlane.f32.xlu0 %v476
    %v478 = vpop.xlane.xlu0 %477
    %v479 = vsel %vm79, %v347, 0.0
    %480 = vadd.xlane.f32.xlu0 %v479
    %v481 = vpop.xlane.xlu0 %480
    %v482 = vsel %vm79, %v349, 0.0
    %483 = vadd.xlane.f32.xlu0 %v482
    %v484 = vpop.xlane.xlu0 %483
    %v485 = vsel %vm79, %v351, 0.0
    %486 = vadd.xlane.f32.xlu0 %v485
    %v487 = vpop.xlane.xlu0 %486
    %v488 = vsel %vm79, %v353, 0.0
    %489 = vadd.xlane.f32.xlu0 %v488
    %v490 = vpop.xlane.xlu0 %489
    %v491 = vsel %vm79, %v355, 0.0
    %492 = vadd.xlane.f32.xlu0 %v491
    %v493 = vpop.xlane.xlu0 %492
    %v494 = vsel %vm79, %v357, 0.0
    %495 = vadd.xlane.f32.xlu0 %v494
    %v496 = vpop.xlane.xlu0 %495
    %v497 = vsel %vm79, %v359, 0.0
    %498 = vadd.xlane.f32.xlu0 %v497
    %v499 = vpop.xlane.xlu0 %498
    %v500 = vsel %vm79, %v361, 0.0
    %501 = vadd.xlane.f32.xlu0 %v500
    %v502 = vpop.xlane.xlu0 %501
    %v503 = vsel %vm79, %v363, 0.0
    %504 = vadd.xlane.f32.xlu0 %v503
    %v505 = vpop.xlane.xlu0 %504
    %v506 = vsel %vm79, %v365, 0.0
    %507 = vadd.xlane.f32.xlu0 %v506
    %v508 = vpop.xlane.xlu0 %507
    %v509 = vsel %vm79, %v367, 0.0
    %510 = vadd.xlane.f32.xlu0 %v509
    %v511 = vpop.xlane.xlu0 %510
    %v512 = vsel %vm79, %v369, 0.0
    %513 = vadd.xlane.f32.xlu0 %v512
    %v514 = vpop.xlane.xlu0 %513
    %v515 = vsel %vm79, %v371, 0.0
    %516 = vadd.xlane.f32.xlu0 %v515
    %v517 = vpop.xlane.xlu0 %516
    %v518 = vsel %vm79, %v373, 0.0
    %519 = vadd.xlane.f32.xlu0 %v518
    %v520 = vpop.xlane.xlu0 %519
    %v521 = vsel %vm79, %v375, 0.0
    %522 = vadd.xlane.f32.xlu0 %v521
    %v523 = vpop.xlane.xlu0 %522
    %v524 = vsel %vm79, %v377, 0.0
    %525 = vadd.xlane.f32.xlu0 %v524
    %v526 = vpop.xlane.xlu0 %525
    %v527 = vsel %vm79, %v379, 0.0
    %528 = vadd.xlane.f32.xlu0 %v527
    %v529 = vpop.xlane.xlu0 %528
    %v530 = vsel %vm79, %v381, 0.0
    %531 = vadd.xlane.f32.xlu0 %v530
    %v532 = vpop.xlane.xlu0 %531
    %v533 = vsel %vm79, %v383, 0.0
    %534 = vadd.xlane.f32.xlu0 %v533
    %v535 = vpop.xlane.xlu0 %534
    %v536 = vsel %vm79, %v385, 0.0
    %537 = vadd.xlane.f32.xlu0 %v536
    %v538 = vpop.xlane.xlu0 %537
    %v539 = vsel %vm79, %v387, 0.0
    %540 = vadd.xlane.f32.xlu0 %v539
    %v541 = vpop.xlane.xlu0 %540
    %v542 = vsel %vm79, %v389, 0.0
    %543 = vadd.xlane.f32.xlu0 %v542
    %v544 = vpop.xlane.xlu0 %543
    %v545 = vsel %vm79, %v391, 0.0
    %546 = vadd.xlane.f32.xlu0 %v545
    %v547 = vpop.xlane.xlu0 %546
    %v548 = vsel %vm79, %v393, 0.0
    %549 = vadd.xlane.f32.xlu0 %v548
    %v550 = vpop.xlane.xlu0 %549
    %v551 = vsel %vm79, %v395, 0.0
    %552 = vadd.xlane.f32.xlu0 %v551
    %v553 = vpop.xlane.xlu0 %552
    %v554 = vsel %vm79, %v397, 0.0
    %555 = vadd.xlane.f32.xlu0 %v554
    %v556 = vpop.xlane.xlu0 %555
    %v557 = vsel %vm79, %v399, 0.0
    %558 = vadd.xlane.f32.xlu0 %v557
    %v559 = vpop.xlane.xlu0 %558
    %v560 = vsel %vm79, %v401, 0.0
    %561 = vadd.xlane.f32.xlu0 %v560
    %v562 = vpop.xlane.xlu0 %561
    %v563 = vsel %vm79, %v403, 0.0
    %564 = vadd.xlane.f32.xlu0 %v563
    %v565 = vpop.xlane.xlu0 %564
    %v566 = vsel %vm79, %v405, 0.0
    %567 = vadd.xlane.f32.xlu0 %v566
    %v568 = vpop.xlane.xlu0 %567
    %v569 = vsel %vm79, %v407, 0.0
    %570 = vadd.xlane.f32.xlu0 %v569
    %v571 = vpop.xlane.xlu0 %570
    %v572 = vsel %vm79, %v409, 0.0
    %573 = vadd.xlane.f32.xlu0 %v572
    %v574 = vpop.xlane.xlu0 %573
    %v575 = vsel %vm79, %v411, 0.0
    %576 = vadd.xlane.f32.xlu0 %v575
    %v577 = vpop.xlane.xlu0 %576
    %v578 = vsel %vm79, %v413, 0.0
    %579 = vadd.xlane.f32.xlu0 %v578
    %v580 = vpop.xlane.xlu0 %579
    %v581 = vsel %vm79, %v415, 0.0
    %582 = vadd.xlane.f32.xlu0 %v581
    %v583 = vpop.xlane.xlu0 %582
    %v584 = vsel %vm79, %v417, 0.0
    %585 = vadd.xlane.f32.xlu0 %v584
    %v586 = vpop.xlane.xlu0 %585
    %v587 = vsel %vm79, %v419, 0.0
    %588 = vadd.xlane.f32.xlu0 %v587
    %v589 = vpop.xlane.xlu0 %588
    %v590 = vsel %vm79, %v421, 0.0
    %591 = vadd.xlane.f32.xlu0 %v590
    %v592 = vpop.xlane.xlu0 %591
    %v593 = vsel %vm79, %v423, 0.0
    %594 = vadd.xlane.f32.xlu0 %v593
    %v595 = vpop.xlane.xlu0 %594
    %v596 = vsel %vm79, %v425, 0.0
    %597 = vadd.xlane.f32.xlu0 %v596
    %v598 = vpop.xlane.xlu0 %597
    %v599 = vsel %vm79, %v427, 0.0
    %600 = vadd.xlane.f32.xlu0 %v599
    %v601 = vpop.xlane.xlu0 %600
    %v602 = vsel %vm79, %v429, 0.0
    %603 = vadd.xlane.f32.xlu0 %v602
    %v604 = vpop.xlane.xlu0 %603
    %v605 = vsel %vm79, %v431, 0.0
    %606 = vadd.xlane.f32.xlu0 %v605
    %v607 = vpop.xlane.xlu0 %606
    %v608 = vsel %vm79, %v433, 0.0
    %609 = vadd.xlane.f32.xlu0 %v608
    %v610 = vpop.xlane.xlu0 %609
    %v611 = vsel %vm79, %v435, 0.0
    %612 = vadd.xlane.f32.xlu0 %v611
    %v613 = vpop.xlane.xlu0 %612
    %v614 = vsel %vm79, %v437, 0.0
    %615 = vadd.xlane.f32.xlu0 %v614
    %v616 = vpop.xlane.xlu0 %615
    %v617 = vsel %vm79, %v439, 0.0
    %618 = vadd.xlane.f32.xlu0 %v617
    %v619 = vpop.xlane.xlu0 %618
    %v620 = vsel %vm79, %v441, 0.0
    %621 = vadd.xlane.f32.xlu0 %v620
    %v622 = vpop.xlane.xlu0 %621
    %v623 = vsel %vm79, %v443, 0.0
    %624 = vadd.xlane.f32.xlu0 %v623
    %v625 = vpop.xlane.xlu0 %624
    %v626 = vsel %vm79, %v445, 0.0
    %627 = vadd.xlane.f32.xlu0 %v626
    %v628 = vpop.xlane.xlu0 %627
    %v629 = vsel %vm79, %v447, 0.0
    %630 = vadd.xlane.f32.xlu0 %v629
    %v631 = vpop.xlane.xlu0 %630
    %v632 = vsel %vm79, %v449, 0.0
    %633 = vadd.xlane.f32.xlu0 %v632
    %v634 = vpop.xlane.xlu0 %633
    %v635 = vsel %vm79, %v451, 0.0
    %636 = vadd.xlane.f32.xlu0 %v635
    %v637 = vpop.xlane.xlu0 %636
    %v638 = vsel %vm79, %v453, 0.0
    %639 = vadd.xlane.f32.xlu0 %v638
    %v640 = vpop.xlane.xlu0 %639
    %v641 = vsel %vm79, %v455, 0.0
    %642 = vadd.xlane.f32.xlu0 %v641
    %v643 = vpop.xlane.xlu0 %642
    %v644 = vsel %vm79, %v457, 0.0
    %645 = vadd.xlane.f32.xlu0 %v644
    %v646 = vpop.xlane.xlu0 %645
    %v647 = vsel %vm79, %v459, 0.0
    %648 = vadd.xlane.f32.xlu0 %v647
    %v649 = vpop.xlane.xlu0 %648
    %v650 = vsel %vm79, %v461, 0.0
    %651 = vadd.xlane.f32.xlu0 %v650
    %v652 = vpop.xlane.xlu0 %651
    %v653 = vsel %vm79, %v463, 0.0
    %654 = vadd.xlane.f32.xlu0 %v653
    %v655 = vpop.xlane.xlu0 %654
    %v656 = vmul.f32 %v337, %v272
    %v657 = vmul.f32 %v339, %v273
    %v658 = vmul.f32 %v341, %v274
    %v659 = vmul.f32 %v343, %v275
    %v660 = vmul.f32 %v345, %v276
    %v661 = vmul.f32 %v347, %v277
    %v662 = vmul.f32 %v349, %v278
    %v663 = vmul.f32 %v351, %v279
    %v664 = vmul.f32 %v353, %v280
    %v665 = vmul.f32 %v355, %v281
    %v666 = vmul.f32 %v357, %v282
    %v667 = vmul.f32 %v359, %v283
    %v668 = vmul.f32 %v361, %v284
    %v669 = vmul.f32 %v363, %v285
    %v670 = vmul.f32 %v365, %v286
    %v671 = vmul.f32 %v367, %v287
    %v672 = vmul.f32 %v369, %v288
    %v673 = vmul.f32 %v371, %v289
    %v674 = vmul.f32 %v373, %v290
    %v675 = vmul.f32 %v375, %v291
    %v676 = vmul.f32 %v377, %v292
    %v677 = vmul.f32 %v379, %v293
    %v678 = vmul.f32 %v381, %v294
    %v679 = vmul.f32 %v383, %v295
    %v680 = vmul.f32 %v385, %v296
    %v681 = vmul.f32 %v387, %v297
    %v682 = vmul.f32 %v389, %v298
    %v683 = vmul.f32 %v391, %v299
    %v684 = vmul.f32 %v393, %v300
    %v685 = vmul.f32 %v395, %v301
    %v686 = vmul.f32 %v397, %v302
    %v687 = vmul.f32 %v399, %v303
    %v688 = vmul.f32 %v401, %v304
    %v689 = vmul.f32 %v403, %v305
    %v690 = vmul.f32 %v405, %v306
    %v691 = vmul.f32 %v407, %v307
    %v692 = vmul.f32 %v409, %v308
    %v693 = vmul.f32 %v411, %v309
    %v694 = vmul.f32 %v413, %v310
    %v695 = vmul.f32 %v415, %v311
    %v696 = vmul.f32 %v417, %v312
    %v697 = vmul.f32 %v419, %v313
    %v698 = vmul.f32 %v421, %v314
    %v699 = vmul.f32 %v423, %v315
    %v700 = vmul.f32 %v425, %v316
    %v701 = vmul.f32 %v427, %v317
    %v702 = vmul.f32 %v429, %v318
    %v703 = vmul.f32 %v431, %v319
    %v704 = vmul.f32 %v433, %v320
    %v705 = vmul.f32 %v435, %v321
    %v706 = vmul.f32 %v437, %v322
    %v707 = vmul.f32 %v439, %v323
    %v708 = vmul.f32 %v441, %v324
    %v709 = vmul.f32 %v443, %v325
    %v710 = vmul.f32 %v445, %v326
    %v711 = vmul.f32 %v447, %v327
    %v712 = vmul.f32 %v449, %v328
    %v713 = vmul.f32 %v451, %v329
    %v714 = vmul.f32 %v453, %v330
    %v715 = vmul.f32 %v455, %v331
    %v716 = vmul.f32 %v457, %v332
    %v717 = vmul.f32 %v459, %v333
    %v718 = vmul.f32 %v461, %v334
    %v719 = vmul.f32 %v463, %v335
    %v720 = vsel %vm79, %v656, 0.0
    %721 = vadd.xlane.f32.xlu0 %v720
    %v722 = vpop.xlane.xlu0 %721
    %v723 = vsel %vm79, %v657, 0.0
    %724 = vadd.xlane.f32.xlu0 %v723
    %v725 = vpop.xlane.xlu0 %724
    %v726 = vsel %vm79, %v658, 0.0
    %727 = vadd.xlane.f32.xlu0 %v726
    %v728 = vpop.xlane.xlu0 %727
    %v729 = vsel %vm79, %v659, 0.0
    %730 = vadd.xlane.f32.xlu0 %v729
    %v731 = vpop.xlane.xlu0 %730
    %v732 = vsel %vm79, %v660, 0.0
    %733 = vadd.xlane.f32.xlu0 %v732
    %v734 = vpop.xlane.xlu0 %733
    %v735 = vsel %vm79, %v661, 0.0
    %736 = vadd.xlane.f32.xlu0 %v735
    %v737 = vpop.xlane.xlu0 %736
    %v738 = vsel %vm79, %v662, 0.0
    %739 = vadd.xlane.f32.xlu0 %v738
    %v740 = vpop.xlane.xlu0 %739
    %v741 = vsel %vm79, %v663, 0.0
    %742 = vadd.xlane.f32.xlu0 %v741
    %v743 = vpop.xlane.xlu0 %742
    %v744 = vsel %vm79, %v664, 0.0
    %745 = vadd.xlane.f32.xlu0 %v744
    %v746 = vpop.xlane.xlu0 %745
    %v747 = vsel %vm79, %v665, 0.0
    %748 = vadd.xlane.f32.xlu0 %v747
    %v749 = vpop.xlane.xlu0 %748
    %v750 = vsel %vm79, %v666, 0.0
    %751 = vadd.xlane.f32.xlu0 %v750
    %v752 = vpop.xlane.xlu0 %751
    %v753 = vsel %vm79, %v667, 0.0
    %754 = vadd.xlane.f32.xlu0 %v753
    %v755 = vpop.xlane.xlu0 %754
    %v756 = vsel %vm79, %v668, 0.0
    %757 = vadd.xlane.f32.xlu0 %v756
    %v758 = vpop.xlane.xlu0 %757
    %v759 = vsel %vm79, %v669, 0.0
    %760 = vadd.xlane.f32.xlu0 %v759
    %v761 = vpop.xlane.xlu0 %760
    %v762 = vsel %vm79, %v670, 0.0
    %763 = vadd.xlane.f32.xlu0 %v762
    %v764 = vpop.xlane.xlu0 %763
    %v765 = vsel %vm79, %v671, 0.0
    %766 = vadd.xlane.f32.xlu0 %v765
    %v767 = vpop.xlane.xlu0 %766
    %v768 = vsel %vm79, %v672, 0.0
    %769 = vadd.xlane.f32.xlu0 %v768
    %v770 = vpop.xlane.xlu0 %769
    %v771 = vsel %vm79, %v673, 0.0
    %772 = vadd.xlane.f32.xlu0 %v771
    %v773 = vpop.xlane.xlu0 %772
    %v774 = vsel %vm79, %v674, 0.0
    %775 = vadd.xlane.f32.xlu0 %v774
    %v776 = vpop.xlane.xlu0 %775
    %v777 = vsel %vm79, %v675, 0.0
    %778 = vadd.xlane.f32.xlu0 %v777
    %v779 = vpop.xlane.xlu0 %778
    %v780 = vsel %vm79, %v676, 0.0
    %781 = vadd.xlane.f32.xlu0 %v780
    %v782 = vpop.xlane.xlu0 %781
    %v783 = vsel %vm79, %v677, 0.0
    %784 = vadd.xlane.f32.xlu0 %v783
    %v785 = vpop.xlane.xlu0 %784
    %v786 = vsel %vm79, %v678, 0.0
    %787 = vadd.xlane.f32.xlu0 %v786
    %v788 = vpop.xlane.xlu0 %787
    %v789 = vsel %vm79, %v679, 0.0
    %790 = vadd.xlane.f32.xlu0 %v789
    %v791 = vpop.xlane.xlu0 %790
    %v792 = vsel %vm79, %v680, 0.0
    %793 = vadd.xlane.f32.xlu0 %v792
    %v794 = vpop.xlane.xlu0 %793
    %v795 = vsel %vm79, %v681, 0.0
    %796 = vadd.xlane.f32.xlu0 %v795
    %v797 = vpop.xlane.xlu0 %796
    %v798 = vsel %vm79, %v682, 0.0
    %799 = vadd.xlane.f32.xlu0 %v798
    %v800 = vpop.xlane.xlu0 %799
    %v801 = vsel %vm79, %v683, 0.0
    %802 = vadd.xlane.f32.xlu0 %v801
    %v803 = vpop.xlane.xlu0 %802
    %v804 = vsel %vm79, %v684, 0.0
    %805 = vadd.xlane.f32.xlu0 %v804
    %v806 = vpop.xlane.xlu0 %805
    %v807 = vsel %vm79, %v685, 0.0
    %808 = vadd.xlane.f32.xlu0 %v807
    %v809 = vpop.xlane.xlu0 %808
    %v810 = vsel %vm79, %v686, 0.0
    %811 = vadd.xlane.f32.xlu0 %v810
    %v812 = vpop.xlane.xlu0 %811
    %v813 = vsel %vm79, %v687, 0.0
    %814 = vadd.xlane.f32.xlu0 %v813
    %v815 = vpop.xlane.xlu0 %814
    %v816 = vsel %vm79, %v688, 0.0
    %817 = vadd.xlane.f32.xlu0 %v816
    %v818 = vpop.xlane.xlu0 %817
    %v819 = vsel %vm79, %v689, 0.0
    %820 = vadd.xlane.f32.xlu0 %v819
    %v821 = vpop.xlane.xlu0 %820
    %v822 = vsel %vm79, %v690, 0.0
    %823 = vadd.xlane.f32.xlu0 %v822
    %v824 = vpop.xlane.xlu0 %823
    %v825 = vsel %vm79, %v691, 0.0
    %826 = vadd.xlane.f32.xlu0 %v825
    %v827 = vpop.xlane.xlu0 %826
    %v828 = vsel %vm79, %v692, 0.0
    %829 = vadd.xlane.f32.xlu0 %v828
    %v830 = vpop.xlane.xlu0 %829
    %v831 = vsel %vm79, %v693, 0.0
    %832 = vadd.xlane.f32.xlu0 %v831
    %v833 = vpop.xlane.xlu0 %832
    %v834 = vsel %vm79, %v694, 0.0
    %835 = vadd.xlane.f32.xlu0 %v834
    %v836 = vpop.xlane.xlu0 %835
    %v837 = vsel %vm79, %v695, 0.0
    %838 = vadd.xlane.f32.xlu0 %v837
    %v839 = vpop.xlane.xlu0 %838
    %v840 = vsel %vm79, %v696, 0.0
    %841 = vadd.xlane.f32.xlu0 %v840
    %v842 = vpop.xlane.xlu0 %841
    %v843 = vsel %vm79, %v697, 0.0
    %844 = vadd.xlane.f32.xlu0 %v843
    %v845 = vpop.xlane.xlu0 %844
    %v846 = vsel %vm79, %v698, 0.0
    %847 = vadd.xlane.f32.xlu0 %v846
    %v848 = vpop.xlane.xlu0 %847
    %v849 = vsel %vm79, %v699, 0.0
    %850 = vadd.xlane.f32.xlu0 %v849
    %v851 = vpop.xlane.xlu0 %850
    %v852 = vsel %vm79, %v700, 0.0
    %853 = vadd.xlane.f32.xlu0 %v852
    %v854 = vpop.xlane.xlu0 %853
    %v855 = vsel %vm79, %v701, 0.0
    %856 = vadd.xlane.f32.xlu0 %v855
    %v857 = vpop.xlane.xlu0 %856
    %v858 = vsel %vm79, %v702, 0.0
    %859 = vadd.xlane.f32.xlu0 %v858
    %v860 = vpop.xlane.xlu0 %859
    %v861 = vsel %vm79, %v703, 0.0
    %862 = vadd.xlane.f32.xlu0 %v861
    %v863 = vpop.xlane.xlu0 %862
    %v864 = vsel %vm79, %v704, 0.0
    %865 = vadd.xlane.f32.xlu0 %v864
    %v866 = vpop.xlane.xlu0 %865
    %v867 = vsel %vm79, %v705, 0.0
    %868 = vadd.xlane.f32.xlu0 %v867
    %v869 = vpop.xlane.xlu0 %868
    %v870 = vsel %vm79, %v706, 0.0
    %871 = vadd.xlane.f32.xlu0 %v870
    %v872 = vpop.xlane.xlu0 %871
    %v873 = vsel %vm79, %v707, 0.0
    %874 = vadd.xlane.f32.xlu0 %v873
    %v875 = vpop.xlane.xlu0 %874
    %v876 = vsel %vm79, %v708, 0.0
    %877 = vadd.xlane.f32.xlu0 %v876
    %v878 = vpop.xlane.xlu0 %877
    %v879 = vsel %vm79, %v709, 0.0
    %880 = vadd.xlane.f32.xlu0 %v879
    %v881 = vpop.xlane.xlu0 %880
    %v882 = vsel %vm79, %v710, 0.0
    %883 = vadd.xlane.f32.xlu0 %v882
    %v884 = vpop.xlane.xlu0 %883
    %v885 = vsel %vm79, %v711, 0.0
    %886 = vadd.xlane.f32.xlu0 %v885
    %v887 = vpop.xlane.xlu0 %886
    %v888 = vsel %vm79, %v712, 0.0
    %889 = vadd.xlane.f32.xlu0 %v888
    %v890 = vpop.xlane.xlu0 %889
    %v891 = vsel %vm79, %v713, 0.0
    %892 = vadd.xlane.f32.xlu0 %v891
    %v893 = vpop.xlane.xlu0 %892
    %v894 = vsel %vm79, %v714, 0.0
    %895 = vadd.xlane.f32.xlu0 %v894
    %v896 = vpop.xlane.xlu0 %895
    %v897 = vsel %vm79, %v715, 0.0
    %898 = vadd.xlane.f32.xlu0 %v897
    %v899 = vpop.xlane.xlu0 %898
    %v900 = vsel %vm79, %v716, 0.0
    %901 = vadd.xlane.f32.xlu0 %v900
    %v902 = vpop.xlane.xlu0 %901
    %v903 = vsel %vm79, %v717, 0.0
    %904 = vadd.xlane.f32.xlu0 %v903
    %v905 = vpop.xlane.xlu0 %904
    %v906 = vsel %vm79, %v718, 0.0
    %907 = vadd.xlane.f32.xlu0 %v906
    %v908 = vpop.xlane.xlu0 %907
    %v909 = vsel %vm79, %v719, 0.0
    %910 = vadd.xlane.f32.xlu0 %v909
    %v911 = vpop.xlane.xlu0 %910
    %v912 = vlog2.pop %v466
    %v913 = vmul.f32 %v912, 0.6931472
    %v914 = vlog2.pop %v469
    %v915 = vmul.f32 %v914, 0.6931472
    %v916 = vlog2.pop %v472
    %v917 = vmul.f32 %v916, 0.6931472
    %v918 = vlog2.pop %v475
    %v919 = vmul.f32 %v918, 0.6931472
    %v920 = vlog2.pop %v478
    %v921 = vmul.f32 %v920, 0.6931472
    %v922 = vlog2.pop %v481
    %v923 = vmul.f32 %v922, 0.6931472
    %v924 = vlog2.pop %v484
    %v925 = vmul.f32 %v924, 0.6931472
    %v926 = vlog2.pop %v487
    %v927 = vmul.f32 %v926, 0.6931472
    %v928 = vlog2.pop %v490
    %v929 = vmul.f32 %v928, 0.6931472
    %v930 = vlog2.pop %v493
    %v931 = vmul.f32 %v930, 0.6931472
    %v932 = vlog2.pop %v496
    %v933 = vmul.f32 %v932, 0.6931472
    %v934 = vlog2.pop %v499
    %v935 = vmul.f32 %v934, 0.6931472
    %v936 = vlog2.pop %v502
    %v937 = vmul.f32 %v936, 0.6931472
    %v938 = vlog2.pop %v505
    %v939 = vmul.f32 %v938, 0.6931472
    %v940 = vlog2.pop %v508
    %v941 = vmul.f32 %v940, 0.6931472
    %v942 = vlog2.pop %v511
    %v943 = vmul.f32 %v942, 0.6931472
    %v944 = vlog2.pop %v514
    %v945 = vmul.f32 %v944, 0.6931472
    %v946 = vlog2.pop %v517
    %v947 = vmul.f32 %v946, 0.6931472
    %v948 = vlog2.pop %v520
    %v949 = vmul.f32 %v948, 0.6931472
    %v950 = vlog2.pop %v523
    %v951 = vmul.f32 %v950, 0.6931472
    %v952 = vlog2.pop %v526
    %v953 = vmul.f32 %v952, 0.6931472
    %v954 = vlog2.pop %v529
    %v955 = vmul.f32 %v954, 0.6931472
    %v956 = vlog2.pop %v532
    %v957 = vmul.f32 %v956, 0.6931472
    %v958 = vlog2.pop %v535
    %v959 = vmul.f32 %v958, 0.6931472
    %v960 = vlog2.pop %v538
    %v961 = vmul.f32 %v960, 0.6931472
    %v962 = vlog2.pop %v541
    %v963 = vmul.f32 %v962, 0.6931472
    %v964 = vlog2.pop %v544
    %v965 = vmul.f32 %v964, 0.6931472
    %v966 = vlog2.pop %v547
    %v967 = vmul.f32 %v966, 0.6931472
    %v968 = vlog2.pop %v550
    %v969 = vmul.f32 %v968, 0.6931472
    %v970 = vlog2.pop %v553
    %v971 = vmul.f32 %v970, 0.6931472
    %v972 = vlog2.pop %v556
    %v973 = vmul.f32 %v972, 0.6931472
    %v974 = vlog2.pop %v559
    %v975 = vmul.f32 %v974, 0.6931472
    %v976 = vlog2.pop %v562
    %v977 = vmul.f32 %v976, 0.6931472
    %v978 = vlog2.pop %v565
    %v979 = vmul.f32 %v978, 0.6931472
    %v980 = vlog2.pop %v568
    %v981 = vmul.f32 %v980, 0.6931472
    %v982 = vlog2.pop %v571
    %v983 = vmul.f32 %v982, 0.6931472
    %v984 = vlog2.pop %v574
    %v985 = vmul.f32 %v984, 0.6931472
    %v986 = vlog2.pop %v577
    %v987 = vmul.f32 %v986, 0.6931472
    %v988 = vlog2.pop %v580
    %v989 = vmul.f32 %v988, 0.6931472
    %v990 = vlog2.pop %v583
    %v991 = vmul.f32 %v990, 0.6931472
    %v992 = vlog2.pop %v586
    %v993 = vmul.f32 %v992, 0.6931472
    %v994 = vlog2.pop %v589
    %v995 = vmul.f32 %v994, 0.6931472
    %v996 = vlog2.pop %v592
    %v997 = vmul.f32 %v996, 0.6931472
    %v998 = vlog2.pop %v595
    %v999 = vmul.f32 %v998, 0.6931472
    %v1000 = vlog2.pop %v598
    %v1001 = vmul.f32 %v1000, 0.6931472
    %v1002 = vlog2.pop %v601
    %v1003 = vmul.f32 %v1002, 0.6931472
    %v1004 = vlog2.pop %v604
    %v1005 = vmul.f32 %v1004, 0.6931472
    %v1006 = vlog2.pop %v607
    %v1007 = vmul.f32 %v1006, 0.6931472
    %v1008 = vlog2.pop %v610
    %v1009 = vmul.f32 %v1008, 0.6931472
    %v1010 = vlog2.pop %v613
    %v1011 = vmul.f32 %v1010, 0.6931472
    %v1012 = vlog2.pop %v616
    %v1013 = vmul.f32 %v1012, 0.6931472
    %v1014 = vlog2.pop %v619
    %v1015 = vmul.f32 %v1014, 0.6931472
    %v1016 = vlog2.pop %v622
    %v1017 = vmul.f32 %v1016, 0.6931472
    %v1018 = vlog2.pop %v625
    %v1019 = vmul.f32 %v1018, 0.6931472
    %v1020 = vlog2.pop %v628
    %v1021 = vmul.f32 %v1020, 0.6931472
    %v1022 = vlog2.pop %v631
    %v1023 = vmul.f32 %v1022, 0.6931472
    %v1024 = vlog2.pop %v634
    %v1025 = vmul.f32 %v1024, 0.6931472
    %v1026 = vlog2.pop %v637
    %v1027 = vmul.f32 %v1026, 0.6931472
    %v1028 = vlog2.pop %v640
    %v1029 = vmul.f32 %v1028, 0.6931472
    %v1030 = vlog2.pop %v643
    %v1031 = vmul.f32 %v1030, 0.6931472
    %v1032 = vlog2.pop %v646
    %v1033 = vmul.f32 %v1032, 0.6931472
    %v1034 = vlog2.pop %v649
    %v1035 = vmul.f32 %v1034, 0.6931472
    %v1036 = vlog2.pop %v652
    %v1037 = vmul.f32 %v1036, 0.6931472
    %v1038 = vlog2.pop %v655
    %v1039 = vmul.f32 %v1038, 0.6931472
    %v1040 = vrcp.pop %v466
    %v1041 = vmul.f32 %v722, %v1040
    %v1042 = vrcp.pop %v469
    %v1043 = vmul.f32 %v725, %v1042
    %v1044 = vrcp.pop %v472
    %v1045 = vmul.f32 %v728, %v1044
    %v1046 = vrcp.pop %v475
    %v1047 = vmul.f32 %v731, %v1046
    %v1048 = vrcp.pop %v478
    %v1049 = vmul.f32 %v734, %v1048
    %v1050 = vrcp.pop %v481
    %v1051 = vmul.f32 %v737, %v1050
    %v1052 = vrcp.pop %v484
    %v1053 = vmul.f32 %v740, %v1052
    %v1054 = vrcp.pop %v487
    %v1055 = vmul.f32 %v743, %v1054
    %v1056 = vrcp.pop %v490
    %v1057 = vmul.f32 %v746, %v1056
    %v1058 = vrcp.pop %v493
    %v1059 = vmul.f32 %v749, %v1058
    %v1060 = vrcp.pop %v496
    %v1061 = vmul.f32 %v752, %v1060
    %v1062 = vrcp.pop %v499
    %v1063 = vmul.f32 %v755, %v1062
    %v1064 = vrcp.pop %v502
    %v1065 = vmul.f32 %v758, %v1064
    %v1066 = vrcp.pop %v505
    %v1067 = vmul.f32 %v761, %v1066
    %v1068 = vrcp.pop %v508
    %v1069 = vmul.f32 %v764, %v1068
    %v1070 = vrcp.pop %v511
    %v1071 = vmul.f32 %v767, %v1070
    %v1072 = vrcp.pop %v514
    %v1073 = vmul.f32 %v770, %v1072
    %v1074 = vrcp.pop %v517
    %v1075 = vmul.f32 %v773, %v1074
    %v1076 = vrcp.pop %v520
    %v1077 = vmul.f32 %v776, %v1076
    %v1078 = vrcp.pop %v523
    %v1079 = vmul.f32 %v779, %v1078
    %v1080 = vrcp.pop %v526
    %v1081 = vmul.f32 %v782, %v1080
    %v1082 = vrcp.pop %v529
    %v1083 = vmul.f32 %v785, %v1082
    %v1084 = vrcp.pop %v532
    %v1085 = vmul.f32 %v788, %v1084
    %v1086 = vrcp.pop %v535
    %v1087 = vmul.f32 %v791, %v1086
    %v1088 = vrcp.pop %v538
    %v1089 = vmul.f32 %v794, %v1088
    %v1090 = vrcp.pop %v541
    %v1091 = vmul.f32 %v797, %v1090
    %v1092 = vrcp.pop %v544
    %v1093 = vmul.f32 %v800, %v1092
    %v1094 = vrcp.pop %v547
    %v1095 = vmul.f32 %v803, %v1094
    %v1096 = vrcp.pop %v550
    %v1097 = vmul.f32 %v806, %v1096
    %v1098 = vrcp.pop %v553
    %v1099 = vmul.f32 %v809, %v1098
    %v1100 = vrcp.pop %v556
    %v1101 = vmul.f32 %v812, %v1100
    %v1102 = vrcp.pop %v559
    %v1103 = vmul.f32 %v815, %v1102
    %v1104 = vrcp.pop %v562
    %v1105 = vmul.f32 %v818, %v1104
    %v1106 = vrcp.pop %v565
    %v1107 = vmul.f32 %v821, %v1106
    %v1108 = vrcp.pop %v568
    %v1109 = vmul.f32 %v824, %v1108
    %v1110 = vrcp.pop %v571
    %v1111 = vmul.f32 %v827, %v1110
    %v1112 = vrcp.pop %v574
    %v1113 = vmul.f32 %v830, %v1112
    %v1114 = vrcp.pop %v577
    %v1115 = vmul.f32 %v833, %v1114
    %v1116 = vrcp.pop %v580
    %v1117 = vmul.f32 %v836, %v1116
    %v1118 = vrcp.pop %v583
    %v1119 = vmul.f32 %v839, %v1118
    %v1120 = vrcp.pop %v586
    %v1121 = vmul.f32 %v842, %v1120
    %v1122 = vrcp.pop %v589
    %v1123 = vmul.f32 %v845, %v1122
    %v1124 = vrcp.pop %v592
    %v1125 = vmul.f32 %v848, %v1124
    %v1126 = vrcp.pop %v595
    %v1127 = vmul.f32 %v851, %v1126
    %v1128 = vrcp.pop %v598
    %v1129 = vmul.f32 %v854, %v1128
    %v1130 = vrcp.pop %v601
    %v1131 = vmul.f32 %v857, %v1130
    %v1132 = vrcp.pop %v604
    %v1133 = vmul.f32 %v860, %v1132
    %v1134 = vrcp.pop %v607
    %v1135 = vmul.f32 %v863, %v1134
    %v1136 = vrcp.pop %v610
    %v1137 = vmul.f32 %v866, %v1136
    %v1138 = vrcp.pop %v613
    %v1139 = vmul.f32 %v869, %v1138
    %v1140 = vrcp.pop %v616
    %v1141 = vmul.f32 %v872, %v1140
    %v1142 = vrcp.pop %v619
    %v1143 = vmul.f32 %v875, %v1142
    %v1144 = vrcp.pop %v622
    %v1145 = vmul.f32 %v878, %v1144
    %v1146 = vrcp.pop %v625
    %v1147 = vmul.f32 %v881, %v1146
    %v1148 = vrcp.pop %v628
    %v1149 = vmul.f32 %v884, %v1148
    %v1150 = vrcp.pop %v631
    %v1151 = vmul.f32 %v887, %v1150
    %v1152 = vrcp.pop %v634
    %v1153 = vmul.f32 %v890, %v1152
    %v1154 = vrcp.pop %v637
    %v1155 = vmul.f32 %v893, %v1154
    %v1156 = vrcp.pop %v640
    %v1157 = vmul.f32 %v896, %v1156
    %v1158 = vrcp.pop %v643
    %v1159 = vmul.f32 %v899, %v1158
    %v1160 = vrcp.pop %v646
    %v1161 = vmul.f32 %v902, %v1160
    %v1162 = vrcp.pop %v649
    %v1163 = vmul.f32 %v905, %v1162
    %v1164 = vrcp.pop %v652
    %v1165 = vmul.f32 %v908, %v1164
    %v1166 = vrcp.pop %v655
    %v1167 = vmul.f32 %v911, %v1166
    %v1168 = vsub.f32 %v913, %v1041
    %v1169 = vsub.f32 %v915, %v1043
    %v1170 = vsub.f32 %v917, %v1045
    %v1171 = vsub.f32 %v919, %v1047
    %v1172 = vsub.f32 %v921, %v1049
    %v1173 = vsub.f32 %v923, %v1051
    %v1174 = vsub.f32 %v925, %v1053
    %v1175 = vsub.f32 %v927, %v1055
    %v1176 = vsub.f32 %v929, %v1057
    %v1177 = vsub.f32 %v931, %v1059
    %v1178 = vsub.f32 %v933, %v1061
    %v1179 = vsub.f32 %v935, %v1063
    %v1180 = vsub.f32 %v937, %v1065
    %v1181 = vsub.f32 %v939, %v1067
    %v1182 = vsub.f32 %v941, %v1069
    %v1183 = vsub.f32 %v943, %v1071
    %v1184 = vsub.f32 %v945, %v1073
    %v1185 = vsub.f32 %v947, %v1075
    %v1186 = vsub.f32 %v949, %v1077
    %v1187 = vsub.f32 %v951, %v1079
    %v1188 = vsub.f32 %v953, %v1081
    %v1189 = vsub.f32 %v955, %v1083
    %v1190 = vsub.f32 %v957, %v1085
    %v1191 = vsub.f32 %v959, %v1087
    %v1192 = vsub.f32 %v961, %v1089
    %v1193 = vsub.f32 %v963, %v1091
    %v1194 = vsub.f32 %v965, %v1093
    %v1195 = vsub.f32 %v967, %v1095
    %v1196 = vsub.f32 %v969, %v1097
    %v1197 = vsub.f32 %v971, %v1099
    %v1198 = vsub.f32 %v973, %v1101
    %v1199 = vsub.f32 %v975, %v1103
    %v1200 = vsub.f32 %v977, %v1105
    %v1201 = vsub.f32 %v979, %v1107
    %v1202 = vsub.f32 %v981, %v1109
    %v1203 = vsub.f32 %v983, %v1111
    %v1204 = vsub.f32 %v985, %v1113
    %v1205 = vsub.f32 %v987, %v1115
    %v1206 = vsub.f32 %v989, %v1117
    %v1207 = vsub.f32 %v991, %v1119
    %v1208 = vsub.f32 %v993, %v1121
    %v1209 = vsub.f32 %v995, %v1123
    %v1210 = vsub.f32 %v997, %v1125
    %v1211 = vsub.f32 %v999, %v1127
    %v1212 = vsub.f32 %v1001, %v1129
    %v1213 = vsub.f32 %v1003, %v1131
    %v1214 = vsub.f32 %v1005, %v1133
    %v1215 = vsub.f32 %v1007, %v1135
    %v1216 = vsub.f32 %v1009, %v1137
    %v1217 = vsub.f32 %v1011, %v1139
    %v1218 = vsub.f32 %v1013, %v1141
    %v1219 = vsub.f32 %v1015, %v1143
    %v1220 = vsub.f32 %v1017, %v1145
    %v1221 = vsub.f32 %v1019, %v1147
    %v1222 = vsub.f32 %v1021, %v1149
    %v1223 = vsub.f32 %v1023, %v1151
    %v1224 = vsub.f32 %v1025, %v1153
    %v1225 = vsub.f32 %v1027, %v1155
    %v1226 = vsub.f32 %v1029, %v1157
    %v1227 = vsub.f32 %v1031, %v1159
    %v1228 = vsub.f32 %v1033, %v1161
    %v1229 = vsub.f32 %v1035, %v1163
    %v1230 = vsub.f32 %v1037, %v1165
    %v1231 = vsub.f32 %v1039, %v1167
    %s1232 = smul.u32 0, 512
    %v1233 = vlaneseq
    %v1234 = vshrl.u32 %v1233, 7
    %v1235 = vadd.s32 %v1234, 8
    %v1236 = vadd.s32 %v1234, 16
    %v1237 = vadd.s32 %v1234, 24
    %v1238 = vadd.s32 %v1234, 32
    %v1239 = vadd.s32 %v1234, 40
    %v1240 = vadd.s32 %v1234, 48
    %v1241 = vadd.s32 %v1234, 56
    %v1242 = vadd.s32 %v1234, 64
    %v1243 = vadd.s32 %v1234, 72
    %v1244 = vadd.s32 %v1234, 80
    %v1245 = vadd.s32 %v1234, 88
    %v1246 = vadd.s32 %v1234, 96
    %v1247 = vadd.s32 %v1234, 104
    %v1248 = vadd.s32 %v1234, 112
    %v1249 = vadd.s32 %v1234, 120
    %v1250 = vadd.s32 %v1234, 128
    %v1251 = vadd.s32 %v1234, 136
    %v1252 = vadd.s32 %v1234, 144
    %v1253 = vadd.s32 %v1234, 152
    %v1254 = vadd.s32 %v1234, 160
    %v1255 = vadd.s32 %v1234, 168
    %v1256 = vadd.s32 %v1234, 176
    %v1257 = vadd.s32 %v1234, 184
    %v1258 = vadd.s32 %v1234, 192
    %v1259 = vadd.s32 %v1234, 200
    %v1260 = vadd.s32 %v1234, 208
    %v1261 = vadd.s32 %v1234, 216
    %v1262 = vadd.s32 %v1234, 224
    %v1263 = vadd.s32 %v1234, 232
    %v1264 = vadd.s32 %v1234, 240
    %v1265 = vadd.s32 %v1234, 248
    %v1266 = vadd.s32 %v1234, 256
    %v1267 = vadd.s32 %v1234, 264
    %v1268 = vadd.s32 %v1234, 272
    %v1269 = vadd.s32 %v1234, 280
    %v1270 = vadd.s32 %v1234, 288
    %v1271 = vadd.s32 %v1234, 296
    %v1272 = vadd.s32 %v1234, 304
    %v1273 = vadd.s32 %v1234, 312
    %v1274 = vadd.s32 %v1234, 320
    %v1275 = vadd.s32 %v1234, 328
    %v1276 = vadd.s32 %v1234, 336
    %v1277 = vadd.s32 %v1234, 344
    %v1278 = vadd.s32 %v1234, 352
    %v1279 = vadd.s32 %v1234, 360
    %v1280 = vadd.s32 %v1234, 368
    %v1281 = vadd.s32 %v1234, 376
    %v1282 = vadd.s32 %v1234, 384
    %v1283 = vadd.s32 %v1234, 392
    %v1284 = vadd.s32 %v1234, 400
    %v1285 = vadd.s32 %v1234, 408
    %v1286 = vadd.s32 %v1234, 416
    %v1287 = vadd.s32 %v1234, 424
    %v1288 = vadd.s32 %v1234, 432
    %v1289 = vadd.s32 %v1234, 440
    %v1290 = vadd.s32 %v1234, 448
    %v1291 = vadd.s32 %v1234, 456
    %v1292 = vadd.s32 %v1234, 464
    %v1293 = vadd.s32 %v1234, 472
    %v1294 = vadd.s32 %v1234, 480
    %v1295 = vadd.s32 %v1234, 488
    %v1296 = vadd.s32 %v1234, 496
    %v1297 = vadd.s32 %v1234, 504
    %v1298 = vstv %s1232
    %v1299 = vadd.s32 %v1298, %v1234
    %v1300 = vadd.s32 %v1298, %v1235
    %v1301 = vadd.s32 %v1298, %v1236
    %v1302 = vadd.s32 %v1298, %v1237
    %v1303 = vadd.s32 %v1298, %v1238
    %v1304 = vadd.s32 %v1298, %v1239
    %v1305 = vadd.s32 %v1298, %v1240
    %v1306 = vadd.s32 %v1298, %v1241
    %v1307 = vadd.s32 %v1298, %v1242
    %v1308 = vadd.s32 %v1298, %v1243
    %v1309 = vadd.s32 %v1298, %v1244
    %v1310 = vadd.s32 %v1298, %v1245
    %v1311 = vadd.s32 %v1298, %v1246
    %v1312 = vadd.s32 %v1298, %v1247
    %v1313 = vadd.s32 %v1298, %v1248
    %v1314 = vadd.s32 %v1298, %v1249
    %v1315 = vadd.s32 %v1298, %v1250
    %v1316 = vadd.s32 %v1298, %v1251
    %v1317 = vadd.s32 %v1298, %v1252
    %v1318 = vadd.s32 %v1298, %v1253
    %v1319 = vadd.s32 %v1298, %v1254
    %v1320 = vadd.s32 %v1298, %v1255
    %v1321 = vadd.s32 %v1298, %v1256
    %v1322 = vadd.s32 %v1298, %v1257
    %v1323 = vadd.s32 %v1298, %v1258
    %v1324 = vadd.s32 %v1298, %v1259
    %v1325 = vadd.s32 %v1298, %v1260
    %v1326 = vadd.s32 %v1298, %v1261
    %v1327 = vadd.s32 %v1298, %v1262
    %v1328 = vadd.s32 %v1298, %v1263
    %v1329 = vadd.s32 %v1298, %v1264
    %v1330 = vadd.s32 %v1298, %v1265
    %v1331 = vadd.s32 %v1298, %v1266
    %v1332 = vadd.s32 %v1298, %v1267
    %v1333 = vadd.s32 %v1298, %v1268
    %v1334 = vadd.s32 %v1298, %v1269
    %v1335 = vadd.s32 %v1298, %v1270
    %v1336 = vadd.s32 %v1298, %v1271
    %v1337 = vadd.s32 %v1298, %v1272
    %v1338 = vadd.s32 %v1298, %v1273
    %v1339 = vadd.s32 %v1298, %v1274
    %v1340 = vadd.s32 %v1298, %v1275
    %v1341 = vadd.s32 %v1298, %v1276
    %v1342 = vadd.s32 %v1298, %v1277
    %v1343 = vadd.s32 %v1298, %v1278
    %v1344 = vadd.s32 %v1298, %v1279
    %v1345 = vadd.s32 %v1298, %v1280
    %v1346 = vadd.s32 %v1298, %v1281
    %v1347 = vadd.s32 %v1298, %v1282
    %v1348 = vadd.s32 %v1298, %v1283
    %v1349 = vadd.s32 %v1298, %v1284
    %v1350 = vadd.s32 %v1298, %v1285
    %v1351 = vadd.s32 %v1298, %v1286
    %v1352 = vadd.s32 %v1298, %v1287
    %v1353 = vadd.s32 %v1298, %v1288
    %v1354 = vadd.s32 %v1298, %v1289
    %v1355 = vadd.s32 %v1298, %v1290
    %v1356 = vadd.s32 %v1298, %v1291
    %v1357 = vadd.s32 %v1298, %v1292
    %v1358 = vadd.s32 %v1298, %v1293
    %v1359 = vadd.s32 %v1298, %v1294
    %v1360 = vadd.s32 %v1298, %v1295
    %v1361 = vadd.s32 %v1298, %v1296
    %v1362 = vadd.s32 %v1298, %v1297
    %vm1363 = vcmp.lt.s32.totalorder %v1299, 512
    %vm1364 = vcmp.lt.s32.totalorder %v1300, 512
    %vm1365 = vcmp.lt.s32.totalorder %v1301, 512
    %vm1366 = vcmp.lt.s32.totalorder %v1302, 512
    %vm1367 = vcmp.lt.s32.totalorder %v1303, 512
    %vm1368 = vcmp.lt.s32.totalorder %v1304, 512
    %vm1369 = vcmp.lt.s32.totalorder %v1305, 512
    %vm1370 = vcmp.lt.s32.totalorder %v1306, 512
    %vm1371 = vcmp.lt.s32.totalorder %v1307, 512
    %vm1372 = vcmp.lt.s32.totalorder %v1308, 512
    %vm1373 = vcmp.lt.s32.totalorder %v1309, 512
    %vm1374 = vcmp.lt.s32.totalorder %v1310, 512
    %vm1375 = vcmp.lt.s32.totalorder %v1311, 512
    %vm1376 = vcmp.lt.s32.totalorder %v1312, 512
    %vm1377 = vcmp.lt.s32.totalorder %v1313, 512
    %vm1378 = vcmp.lt.s32.totalorder %v1314, 512
    %vm1379 = vcmp.lt.s32.totalorder %v1315, 512
    %vm1380 = vcmp.lt.s32.totalorder %v1316, 512
    %vm1381 = vcmp.lt.s32.totalorder %v1317, 512
    %vm1382 = vcmp.lt.s32.totalorder %v1318, 512
    %vm1383 = vcmp.lt.s32.totalorder %v1319, 512
    %vm1384 = vcmp.lt.s32.totalorder %v1320, 512
    %vm1385 = vcmp.lt.s32.totalorder %v1321, 512
    %vm1386 = vcmp.lt.s32.totalorder %v1322, 512
    %vm1387 = vcmp.lt.s32.totalorder %v1323, 512
    %vm1388 = vcmp.lt.s32.totalorder %v1324, 512
    %vm1389 = vcmp.lt.s32.totalorder %v1325, 512
    %vm1390 = vcmp.lt.s32.totalorder %v1326, 512
    %vm1391 = vcmp.lt.s32.totalorder %v1327, 512
    %vm1392 = vcmp.lt.s32.totalorder %v1328, 512
    %vm1393 = vcmp.lt.s32.totalorder %v1329, 512
    %vm1394 = vcmp.lt.s32.totalorder %v1330, 512
    %vm1395 = vcmp.lt.s32.totalorder %v1331, 512
    %vm1396 = vcmp.lt.s32.totalorder %v1332, 512
    %vm1397 = vcmp.lt.s32.totalorder %v1333, 512
    %vm1398 = vcmp.lt.s32.totalorder %v1334, 512
    %vm1399 = vcmp.lt.s32.totalorder %v1335, 512
    %vm1400 = vcmp.lt.s32.totalorder %v1336, 512
    %vm1401 = vcmp.lt.s32.totalorder %v1337, 512
    %vm1402 = vcmp.lt.s32.totalorder %v1338, 512
    %vm1403 = vcmp.lt.s32.totalorder %v1339, 512
    %vm1404 = vcmp.lt.s32.totalorder %v1340, 512
    %vm1405 = vcmp.lt.s32.totalorder %v1341, 512
    %vm1406 = vcmp.lt.s32.totalorder %v1342, 512
    %vm1407 = vcmp.lt.s32.totalorder %v1343, 512
    %vm1408 = vcmp.lt.s32.totalorder %v1344, 512
    %vm1409 = vcmp.lt.s32.totalorder %v1345, 512
    %vm1410 = vcmp.lt.s32.totalorder %v1346, 512
    %vm1411 = vcmp.lt.s32.totalorder %v1347, 512
    %vm1412 = vcmp.lt.s32.totalorder %v1348, 512
    %vm1413 = vcmp.lt.s32.totalorder %v1349, 512
    %vm1414 = vcmp.lt.s32.totalorder %v1350, 512
    %vm1415 = vcmp.lt.s32.totalorder %v1351, 512
    %vm1416 = vcmp.lt.s32.totalorder %v1352, 512
    %vm1417 = vcmp.lt.s32.totalorder %v1353, 512
    %vm1418 = vcmp.lt.s32.totalorder %v1354, 512
    %vm1419 = vcmp.lt.s32.totalorder %v1355, 512
    %vm1420 = vcmp.lt.s32.totalorder %v1356, 512
    %vm1421 = vcmp.lt.s32.totalorder %v1357, 512
    %vm1422 = vcmp.lt.s32.totalorder %v1358, 512
    %vm1423 = vcmp.lt.s32.totalorder %v1359, 512
    %vm1424 = vcmp.lt.s32.totalorder %v1360, 512
    %vm1425 = vcmp.lt.s32.totalorder %v1361, 512
    %vm1426 = vcmp.lt.s32.totalorder %v1362, 512
    %v1427 = vsel %vm1363, %v1168, 0.0
    %v1428 = vsel %vm1364, %v1169, 0.0
    %v1429 = vsel %vm1365, %v1170, 0.0
    %v1430 = vsel %vm1366, %v1171, 0.0
    %v1431 = vsel %vm1367, %v1172, 0.0
    %v1432 = vsel %vm1368, %v1173, 0.0
    %v1433 = vsel %vm1369, %v1174, 0.0
    %v1434 = vsel %vm1370, %v1175, 0.0
    %v1435 = vsel %vm1371, %v1176, 0.0
    %v1436 = vsel %vm1372, %v1177, 0.0
    %v1437 = vsel %vm1373, %v1178, 0.0
    %v1438 = vsel %vm1374, %v1179, 0.0
    %v1439 = vsel %vm1375, %v1180, 0.0
    %v1440 = vsel %vm1376, %v1181, 0.0
    %v1441 = vsel %vm1377, %v1182, 0.0
    %v1442 = vsel %vm1378, %v1183, 0.0
    %v1443 = vsel %vm1379, %v1184, 0.0
    %v1444 = vsel %vm1380, %v1185, 0.0
    %v1445 = vsel %vm1381, %v1186, 0.0
    %v1446 = vsel %vm1382, %v1187, 0.0
    %v1447 = vsel %vm1383, %v1188, 0.0
    %v1448 = vsel %vm1384, %v1189, 0.0
    %v1449 = vsel %vm1385, %v1190, 0.0
    %v1450 = vsel %vm1386, %v1191, 0.0
    %v1451 = vsel %vm1387, %v1192, 0.0
    %v1452 = vsel %vm1388, %v1193, 0.0
    %v1453 = vsel %vm1389, %v1194, 0.0
    %v1454 = vsel %vm1390, %v1195, 0.0
    %v1455 = vsel %vm1391, %v1196, 0.0
    %v1456 = vsel %vm1392, %v1197, 0.0
    %v1457 = vsel %vm1393, %v1198, 0.0
    %v1458 = vsel %vm1394, %v1199, 0.0
    %v1459 = vsel %vm1395, %v1200, 0.0
    %v1460 = vsel %vm1396, %v1201, 0.0
    %v1461 = vsel %vm1397, %v1202, 0.0
    %v1462 = vsel %vm1398, %v1203, 0.0
    %v1463 = vsel %vm1399, %v1204, 0.0
    %v1464 = vsel %vm1400, %v1205, 0.0
    %v1465 = vsel %vm1401, %v1206, 0.0
    %v1466 = vsel %vm1402, %v1207, 0.0
    %v1467 = vsel %vm1403, %v1208, 0.0
    %v1468 = vsel %vm1404, %v1209, 0.0
    %v1469 = vsel %vm1405, %v1210, 0.0
    %v1470 = vsel %vm1406, %v1211, 0.0
    %v1471 = vsel %vm1407, %v1212, 0.0
    %v1472 = vsel %vm1408, %v1213, 0.0
    %v1473 = vsel %vm1409, %v1214, 0.0
    %v1474 = vsel %vm1410, %v1215, 0.0
    %v1475 = vsel %vm1411, %v1216, 0.0
    %v1476 = vsel %vm1412, %v1217, 0.0
    %v1477 = vsel %vm1413, %v1218, 0.0
    %v1478 = vsel %vm1414, %v1219, 0.0
    %v1479 = vsel %vm1415, %v1220, 0.0
    %v1480 = vsel %vm1416, %v1221, 0.0
    %v1481 = vsel %vm1417, %v1222, 0.0
    %v1482 = vsel %vm1418, %v1223, 0.0
    %v1483 = vsel %vm1419, %v1224, 0.0
    %v1484 = vsel %vm1420, %v1225, 0.0
    %v1485 = vsel %vm1421, %v1226, 0.0
    %v1486 = vsel %vm1422, %v1227, 0.0
    %v1487 = vsel %vm1423, %v1228, 0.0
    %v1488 = vsel %vm1424, %v1229, 0.0
    %v1489 = vsel %vm1425, %v1230, 0.0
    %v1490 = vsel %vm1426, %v1231, 0.0
    %v1491 = vld [vmem:[#allocation2] sm:$0x1]
    %v1492 = vadd.f32 %v1427, %v1428
    %v1493 = vadd.f32 %v1492, %v1429
    %v1494 = vadd.f32 %v1493, %v1430
    %v1495 = vadd.f32 %v1494, %v1431
    %v1496 = vadd.f32 %v1495, %v1432
    %v1497 = vadd.f32 %v1496, %v1433
    %v1498 = vadd.f32 %v1497, %v1434
    %v1499 = vadd.f32 %v1498, %v1435
    %v1500 = vadd.f32 %v1499, %v1436
    %v1501 = vadd.f32 %v1500, %v1437
    %v1502 = vadd.f32 %v1501, %v1438
    %v1503 = vadd.f32 %v1502, %v1439
    %v1504 = vadd.f32 %v1503, %v1440
    %v1505 = vadd.f32 %v1504, %v1441
    %v1506 = vadd.f32 %v1505, %v1442
    %v1507 = vadd.f32 %v1506, %v1443
    %v1508 = vadd.f32 %v1507, %v1444
    %v1509 = vadd.f32 %v1508, %v1445
    %v1510 = vadd.f32 %v1509, %v1446
    %v1511 = vadd.f32 %v1510, %v1447
    %v1512 = vadd.f32 %v1511, %v1448
    %v1513 = vadd.f32 %v1512, %v1449
    %v1514 = vadd.f32 %v1513, %v1450
    %v1515 = vadd.f32 %v1514, %v1451
    %v1516 = vadd.f32 %v1515, %v1452
    %v1517 = vadd.f32 %v1516, %v1453
    %v1518 = vadd.f32 %v1517, %v1454
    %v1519 = vadd.f32 %v1518, %v1455
    %v1520 = vadd.f32 %v1519, %v1456
    %v1521 = vadd.f32 %v1520, %v1457
    %v1522 = vadd.f32 %v1521, %v1458
    %v1523 = vadd.f32 %v1522, %v1459
    %v1524 = vadd.f32 %v1523, %v1460
    %v1525 = vadd.f32 %v1524, %v1461
    %v1526 = vadd.f32 %v1525, %v1462
    %v1527 = vadd.f32 %v1526, %v1463
    %v1528 = vadd.f32 %v1527, %v1464
    %v1529 = vadd.f32 %v1528, %v1465
    %v1530 = vadd.f32 %v1529, %v1466
    %v1531 = vadd.f32 %v1530, %v1467
    %v1532 = vadd.f32 %v1531, %v1468
    %v1533 = vadd.f32 %v1532, %v1469
    %v1534 = vadd.f32 %v1533, %v1470
    %v1535 = vadd.f32 %v1534, %v1471
    %v1536 = vadd.f32 %v1535, %v1472
    %v1537 = vadd.f32 %v1536, %v1473
    %v1538 = vadd.f32 %v1537, %v1474
    %v1539 = vadd.f32 %v1538, %v1475
    %v1540 = vadd.f32 %v1539, %v1476
    %v1541 = vadd.f32 %v1540, %v1477
    %v1542 = vadd.f32 %v1541, %v1478
    %v1543 = vadd.f32 %v1542, %v1479
    %v1544 = vadd.f32 %v1543, %v1480
    %v1545 = vadd.f32 %v1544, %v1481
    %v1546 = vadd.f32 %v1545, %v1482
    %v1547 = vadd.f32 %v1546, %v1483
    %v1548 = vadd.f32 %v1547, %v1484
    %v1549 = vadd.f32 %v1548, %v1485
    %v1550 = vadd.f32 %v1549, %v1486
    %v1551 = vadd.f32 %v1550, %v1487
    %v1552 = vadd.f32 %v1551, %v1488
    %v1553 = vadd.f32 %v1552, %v1489
    %v1554 = vadd.f32 %v1553, %v1490
    %v1555 = vrot.slane %v1554, 4
    %v1556 = vadd.f32 %v1554, %v1555
    %v1557 = vrot.slane %v1556, 2
    %v1558 = vadd.f32 %v1556, %v1557
    %v1559 = vrot.slane %v1558, 1
    %v1560 = vadd.f32 %v1558, %v1559
    %v1561 = vadd.f32 %v1491, %v1560
    %vm1562 = vcmask 0
    %1563 = vst.msk [vmem:[#allocation2] sm:$0x1] %vm1562, %v1561
    // Predicated region
    $region10: #{tpu_custom_call.1} parent=1 // pred_check
      %p1564 = pneg %p9
    $region11: #{tpu_custom_call.1} parent=1 // pred_check_branch
      %1566 = sbr.rel (%p1564) target = $region13
    $region12: #{tpu_custom_call.1} parent=1 // pred_region
      %v1567 = vld [vmem:[#allocation2] sm:$0x1]
      %v1568 = vmul.f32 %v1567, 0.001953125
      %1569 = vst.msk [vmem:[#allocation2] sm:$0x1] %vm1562, %v1568
    $region13: #{tpu_custom_call.1} parent=1 // pred_fallthru
      _
    // Predicated region
    $region14: #{tpu_custom_call.1} parent=1 // pred_check
      _
    $region15: #{tpu_custom_call.1} parent=1 // pred_check_branch
      %1571 = sbr.rel (0) target = $region17
    $region16: #{tpu_custom_call.1} parent=1 // pred_region
      %s1573 = ssub.s32 16, 16
      %1574 = vsyncadd [#allocation3], %s1573
      %s1576 = sshll.u32 [#allocation2], 4
      %s1577 = int_to_ptr.vmem [resolvable:$true] %s1576
      %1579 = dma.vmem_to_hbm [thread:$0]  %s1577, 16, %s1, [#allocation3]
    $region17: #{tpu_custom_call.1} parent=1 // pred_fallthru
      _
    // Predicated region
    $region18: #{tpu_custom_call.1} parent=1 // pred_check
      _
    $region19: #{tpu_custom_call.1} parent=1 // pred_check_branch
      %1581 = sbr.rel (0) target = $region21
    $region20: #{tpu_custom_call.1} parent=1 // pred_region
      %1582 = dma.done [#allocation3], 16
    $region21: #{tpu_custom_call.1} parent=1 // pred_fallthru
      _
    %1583 = vsyncpa [#allocation3], 1

</llo_original>
